<compile_context>
chip_gen: v7x
topology: tpu7x:2x2x1
jax: 0.10.0
libtpu: 0.0.40
codegen_flags: <defaults>
</compile_context>

<pallas_src>
import functools

import jax
import jax.numpy as jnp
from jax.experimental import pallas as pl
from jax.experimental.pallas import tpu as pltpu

NEG_SLOPE = 0.2      # GATv2Conv default negative_slope
MASK_NEG = -1e30     # masked (non-edge) logit


# ----------------------------- kernel body ----------------------------------

def _gatv2(h, wl, wr, bl, br, att, bias, adj, *, dst_block, pair_dtype):
    """Dense single-head GATv2 on VMEM-resident values (adj[dst, src]).

    Tiled flash-style over destination rows: only an O(dst_block * N * C)
    pair tensor is live at any time (instead of O(N^2 * C)), which removes the
    hard N ceiling on VMEM (64 MiB on v7x) and the vreg spill pressure.
    """
    n = h.shape[0]
    # two separate (lane-aligned) matmuls instead of a lane-packed [wl|wr]
    xl = jnp.dot(h, wl, preferred_element_type=jnp.float32)   # source transform
    xr = jnp.dot(h, wr, preferred_element_type=jnp.float32)   # target transform
    if bl is not None:
        xl = xl + bl
    if br is not None:
        xr = xr + br

    # TODO(synk): on v6e/v7x set pair_dtype=bf16 once N scales (native bf16
    # VALU halves the dominant O(N^2*C) elementwise cost); keep f32 on v5e.
    xl_p = xl.astype(pair_dtype)
    att_p = att.astype(pair_dtype)

    outs, alphas = [], []
    for r0 in range(0, n, dst_block):
        tb = min(dst_block, n - r0)
        xr_b = xr[r0:r0 + tb].astype(pair_dtype)               # [TB, C] dst rows
        adj_b = adj[r0:r0 + tb]                                # [TB, N]
        # e[i, j] = att . leaky_relu(xr[i] + xl[j])   (i = dst, j = src)
        pair = xr_b[:, None, :] + xl_p[None, :, :]             # [TB, N, C]
        pair = jnp.where(pair > 0, pair, NEG_SLOPE * pair)
        e = jnp.sum(pair * att_p[None, :, :], axis=-1).astype(jnp.float32)
        e = jnp.where(adj_b > 0, e, MASK_NEG)
        # invariant: build_adj adds self-loops, so every row max is finite.
        m = jnp.max(e, axis=1, keepdims=True)
        p = jnp.exp(e - m) * adj_b                             # explicit re-mask
        alpha_b = p / jnp.sum(p, axis=1, keepdims=True)        # exact softmax
        out_b = jnp.dot(alpha_b, xl, preferred_element_type=jnp.float32)
        outs.append(out_b)
        alphas.append(alpha_b)

    out = outs[0] if len(outs) == 1 else jnp.concatenate(outs, axis=0)
    alpha = alphas[0] if len(alphas) == 1 else jnp.concatenate(alphas, axis=0)
    return out + bias, alpha


def _encoder_kernel(x_ref, adj_ref, w1_ref, w2_ref, vec_ref, mmse_ref,
                    feat_ref, alpha_ref, *, use_mmse, dst_block, pair_dtype):
    """Fused GATv2 -> GATv2 -> (+ mmse embedding) for one graph (grid step b).

    x_ref   : [1, N, F+1]  node features with a ones column (layer-1 biases are
                           folded into w1 rows).
    adj_ref : [1, N, N]    dense adjacency (dst, src) with self-loops.
    w1_ref  : [2, F+1, C]  stacked [wl1|bl1], [wr1|br1]  (VMEM-resident).
    w2_ref  : [2, C, C]    stacked wl2, wr2              (VMEM-resident).
    vec_ref : [8, C]       rows: 0 att1, 1 out_bias1, 2 bl2, 3 br2,
                                 4 att2, 5 out_bias2, 6 mmse_w, 7 mmse_b.
    mmse_ref: [B] f32 in SMEM (one scalar per graph).
    """
    x = x_ref[0]
    adj = adj_ref[0]
    vec = vec_ref[...]

    h1, alpha1 = _gatv2(x, w1_ref[0], w1_ref[1], None, None,
                        vec[0:1], vec[1:2], adj,
                        dst_block=dst_block, pair_dtype=pair_dtype)
    alpha_ref[0] = alpha1

    # TODO(synk): PyG's second GATv2Conv only consumes attn_weights as edge_attr
    # if edge_dim is set; as in the original module they are returned, not used.
    h2, _ = _gatv2(h1, w2_ref[0], w2_ref[1], vec[2:3], vec[3:4],
                   vec[4:5], vec[5:6], adj,
                   dst_block=dst_block, pair_dtype=pair_dtype)

    if use_mmse:
        # fused nn.Linear(1, latent_dim) on the per-graph MMSE scalar (SMEM)
        h2 = h2 + (mmse_ref[pl.program_id(0)] * vec[6:7] + vec[7:8])

    feat_ref[0] = h2


# ----------------------------- pallas wrapper --------------------------------

def pack_params(params):
    """One-time parameter packing (outside the forward pass)."""
    g1, g2, mm = params["gat1"], params["gat2"], params["mmse"]
    # layer 1: fold biases (ones column is appended to x in the wrapper)
    w1 = jnp.stack([jnp.concatenate([g1["wl"], g1["bl"]], axis=0),
                    jnp.concatenate([g1["wr"], g1["br"]], axis=0)])  # [2, F+1, C]
    w2 = jnp.stack([g2["wl"], g2["wr"]])                             # [2, C, C]
    vec = jnp.concatenate([g1["att"], g1["bias"],
                           g2["bl"], g2["br"], g2["att"], g2["bias"],
                           mm["w"], mm["b"]], axis=0)                # [8, C]
    return dict(w1=w1, w2=w2, vec=vec)


def fused_encoder(x_b, adj_b, packed, mmse_b, mmse_condition,
                  *, dst_block=8, pair_dtype=jnp.float32):
    """Batched fused encoder.

    x_b:   [B, N, F] node features per graph/subject.
    adj_b: [B, N, N] dense adjacency (dst, src) with self-loops.
    mmse_b: [B] (or [B, 1]) MMSE scalar per graph.
    Returns (features [B, N, C], alpha1 [B, N, N]).
    """
    bt, n, _ = x_b.shape
    w1, w2, vec = packed["w1"], packed["w2"], packed["vec"]
    f1 = int(w1.shape[1])
    c = int(vec.shape[1])

    # ones column -> layer-1 biases folded into the w1 matmuls
    x_aug = jnp.concatenate(
        [x_b.astype(jnp.float32), jnp.ones((bt, n, 1), jnp.float32)], axis=-1)
    mmse_flat = jnp.reshape(mmse_b, (bt,)).astype(jnp.float32)

    # advisory cost hint so XLA schedules surrounding ops around the call
    flops = int(bt * (4 * n * f1 * c + 4 * n * c * c
                      + 2 * 8 * n * n * c      # pair / lrelu / att reduce
                      + 2 * 2 * n * n * c))    # alpha @ xl
    transcendentals = int(bt * 2 * n * n)
    bytes_accessed = int(4 * (x_aug.size + adj_b.size + w1.size + w2.size
                              + vec.size + mmse_flat.size
                              + bt * n * c + bt * n * n))

    kernel = functools.partial(_encoder_kernel, use_mmse=bool(mmse_condition),
                               dst_block=int(dst_block), pair_dtype=pair_dtype)

    # TODO(synk): when N/latent grow, set vmem_limit_bytes explicitly in
    # CompilerParams (scoped default is 16/32 MiB) and shrink dst_block.
    feats, alpha = pl.pallas_call(
        kernel,
        out_shape=(jax.ShapeDtypeStruct((bt, n, c), jnp.float32),
                   jax.ShapeDtypeStruct((bt, n, n), jnp.float32)),
        grid=(bt,),
        in_specs=[
            pl.BlockSpec((1, n, f1), lambda b: (b, 0, 0)),         # per-graph x
            pl.BlockSpec((1, n, n), lambda b: (b, 0, 0)),          # per-graph adj
            pl.BlockSpec((2, f1, c), lambda b: (0, 0, 0)),         # resident w1
            pl.BlockSpec((2, c, c), lambda b: (0, 0, 0)),          # resident w2
            pl.BlockSpec((8, c), lambda b: (0, 0)),                # resident vec
            pl.BlockSpec(memory_space=pltpu.MemorySpace.SMEM),     # mmse scalars
        ],
        out_specs=(pl.BlockSpec((1, n, c), lambda b: (b, 0, 0)),
                   pl.BlockSpec((1, n, n), lambda b: (b, 0, 0))),
        compiler_params=pltpu.CompilerParams(
            dimension_semantics=("parallel",)),                    # 2 TCs on v7x
        cost_estimate=pl.CostEstimate(flops=flops,
                                      transcendentals=transcendentals,
                                      bytes_accessed=bytes_accessed),
    )(x_aug, adj_b, w1, w2, vec, mmse_flat)
    return feats, alpha


# ----------------------------- module forward --------------------------------

def build_adj(edge_index, n_nodes):
    src, dst = edge_index
    adj = jnp.zeros((n_nodes, n_nodes), jnp.float32)
    adj = adj.at[dst, src].set(1.0)
    idx = jnp.arange(n_nodes)
    adj = adj.at[idx, idx].set(1.0)       # add_self_loops=True
    return adj


def edge_order(edge_index, n_nodes):
    """PyG attention-weight ordering: original edges followed by self-loops.

    Static graph -> build once and reuse (cheap XLA gather afterwards)."""
    src_sl = jnp.concatenate([edge_index[0], jnp.arange(n_nodes)])
    dst_sl = jnp.concatenate([edge_index[1], jnp.arange(n_nodes)])
    return src_sl, dst_sl


def graph_connection_encoder_batched(x_b, adj_b, mmse_b, src_sl, dst_sl, packed,
                                     mmse_condition=True):
    """Batched forward over B graphs/subjects. Returns (features, attn_weights)."""
    feats, alpha = fused_encoder(x_b, adj_b, packed, mmse_b, mmse_condition)
    attn_weights = alpha[:, dst_sl, src_sl]                   # [B, E + N]
    return feats, attn_weights


def graph_connection_encoder(x, edge_index, mmse_score, packed,
                             mmse_condition=True):
    """Single-graph forward matching the PyTorch module's signature."""
    n = x.shape[0]
    adj = build_adj(edge_index, n)
    src_sl, dst_sl = edge_order(edge_index, n)
    feats, attn = graph_connection_encoder_batched(
        x[None], adj[None], jnp.reshape(mmse_score, (1,)), src_sl, dst_sl,
        packed, mmse_condition)
    return feats[0], attn[0]


# ----------------------------- params / reference ----------------------------

def init_gatv2_params(key, f_in, c):
    ks = jax.random.split(key, 6)
    s = 1.0 / jnp.sqrt(jnp.float32(f_in))
    return dict(
        wl=jax.random.normal(ks[0], (f_in, c), jnp.float32) * s,     # lin_l.weight^T
        bl=jax.random.normal(ks[1], (1, c), jnp.float32) * 0.1,      # lin_l.bias
        wr=jax.random.normal(ks[2], (f_in, c), jnp.float32) * s,     # lin_r.weight^T
        br=jax.random.normal(ks[3], (1, c), jnp.float32) * 0.1,      # lin_r.bias
        att=jax.random.normal(ks[4], (1, c), jnp.float32) * (1.0 / jnp.sqrt(jnp.float32(c))),
        bias=jax.random.normal(ks[5], (1, c), jnp.float32) * 0.1,    # output bias
    )


def _gatv2_ref(x, p, adj):
    xl = x @ p["wl"] + p["bl"]
    xr = x @ p["wr"] + p["br"]
    pair = xr[:, None, :] + xl[None, :, :]
    pair = jnp.where(pair > 0, pair, NEG_SLOPE * pair)
    e = jnp.sum(pair * p["att"][None, :, :], axis=-1)
    e = jnp.where(adj > 0, e, MASK_NEG)
    m = jnp.max(e, axis=1, keepdims=True)
    pw = jnp.exp(e - m) * adj
    alpha = pw / jnp.sum(pw, axis=1, keepdims=True)
    return alpha @ xl + p["bias"], alpha


def _encoder_ref(x, edge_index, mmse, params):
    n = x.shape[0]
    adj = build_adj(edge_index, n)
    f1, a1 = _gatv2_ref(x, params["gat1"], adj)
    src_sl, dst_sl = edge_order(edge_index, n)
    attn_w = a1[dst_sl, src_sl]
    f2, _ = _gatv2_ref(f1, params["gat2"], adj)
    emb = mmse @ params["mmse"]["w"] + params["mmse"]["b"]
    return f2 + emb, attn_w


# ----------------------------- main -------------------------------------------

if __name__ == "__main__":
    N_NODES = 16          # EEG electrodes / graph nodes
    N_TIMESTEPS = 8       # n_eeg_timesteps (per-node input features)
    LATENT = 32           # latent_dim
    BATCH = 4             # subjects per dispatch (grid axis)

    key = jax.random.PRNGKey(0)
    kx, km, kg1, kg2, kmp = jax.random.split(key, 5)

    x_b = jax.random.normal(kx, (BATCH, N_NODES, N_TIMESTEPS), jnp.float32)
    mmse_b = jax.random.normal(km, (BATCH, 1), jnp.float32)

    # deterministic bidirectional ring graph shared by all subjects
    idx = jnp.arange(N_NODES)
    src = jnp.concatenate([idx, (idx + 1) % N_NODES])
    dst = jnp.concatenate([(idx + 1) % N_NODES, idx])
    edge_index = jnp.stack([src, dst]).astype(jnp.int32)

    kw, kb = jax.random.split(kmp)
    params = dict(
        gat1=init_gatv2_params(kg1, N_TIMESTEPS, LATENT),
        gat2=init_gatv2_params(kg2, LATENT, LATENT),
        mmse=dict(w=jax.random.normal(kw, (1, LATENT), jnp.float32),   # Linear(1, latent).weight^T
                  b=jax.random.normal(kb, (1, LATENT), jnp.float32) * 0.1),
    )
    packed = pack_params(params)   # one-time packing for the fused kernel

    # static graph: adjacency and PyG edge ordering built once, reused per call
    adj = build_adj(edge_index, N_NODES)
    adj_b = jnp.broadcast_to(adj, (BATCH, N_NODES, N_NODES))
    src_sl, dst_sl = edge_order(edge_index, N_NODES)

    feats, attn_w = graph_connection_encoder_batched(
        x_b, adj_b, mmse_b, src_sl, dst_sl, packed, mmse_condition=True)
    feats = jax.block_until_ready(feats)
    attn_w = jax.block_until_ready(attn_w)

    assert feats.shape == (BATCH, N_NODES, LATENT)
    assert attn_w.shape == (BATCH, edge_index.shape[1] + N_NODES)

    # per-subject check against the pure-JAX reference (exact softmax now)
    for b in range(BATCH):
        ref_f, ref_a = _encoder_ref(x_b[b], edge_index, mmse_b[b:b + 1], params)
        assert jnp.allclose(feats[b], ref_f, atol=1e-4, rtol=1e-4)
        assert jnp.allclose(attn_w[b], ref_a, atol=1e-5, rtol=1e-5)

    # single-graph API matching the original module forward
    f0, a0 = graph_connection_encoder(x_b[0], edge_index, mmse_b[0:1], packed,
                                      mmse_condition=True)
    f0 = jax.block_until_ready(f0)
    ref_f0, ref_a0 = _encoder_ref(x_b[0], edge_index, mmse_b[0:1], params)
    assert jnp.allclose(f0, ref_f0, atol=1e-4, rtol=1e-4)
    assert jnp.allclose(a0, ref_a0, atol=1e-5, rtol=1e-5)

    print("KERNEL_OK")
</pallas_src>

<mosaic_0001>
module attributes {stable_mosaic.version = 11 : i64} {
  func.func @_encoder_kernel(%arg0: i32, %arg1: memref<1x16x9xf32, #tpu.memory_space<vmem>>, %arg2: memref<1x16x16xf32, #tpu.memory_space<vmem>>, %arg3: memref<2x9x32xf32, #tpu.memory_space<vmem>>, %arg4: memref<2x32x32xf32, #tpu.memory_space<vmem>>, %arg5: memref<8x32xf32, #tpu.memory_space<vmem>>, %arg6: memref<4xf32, #tpu.memory_space<smem>>, %arg7: memref<1x16x32xf32, #tpu.memory_space<vmem>>, %arg8: memref<1x16x16xf32, #tpu.memory_space<vmem>>) attributes {dimension_semantics = [#tpu.dimension_semantics<parallel>], iteration_bounds = array<i64: 4>, scalar_prefetch = 0 : i64, scratch_operands = 0 : i64, tpu.core_type = #tpu.core_type<tc>, window_params = [{transform_indices = @transform_0, window_bounds = array<i64: 1, 16, 9>}, {transform_indices = @transform_1, window_bounds = array<i64: 1, 16, 16>}, {pipeline_mode = #tpu.pipeline_mode<synchronous>, transform_indices = @transform_2, window_bounds = array<i64: 2, 9, 32>}, {pipeline_mode = #tpu.pipeline_mode<synchronous>, transform_indices = @transform_3, window_bounds = array<i64: 2, 32, 32>}, {pipeline_mode = #tpu.pipeline_mode<synchronous>, transform_indices = @transform_4, window_bounds = array<i64: 8, 32>}, {transform_indices = @transform_5, window_bounds = array<i64: 4>}, {transform_indices = @transform_6, window_bounds = array<i64: 1, 16, 32>}, {transform_indices = @transform_7, window_bounds = array<i64: 1, 16, 16>}]} {
    %c0 = arith.constant 0 : index
    %c0_0 = arith.constant 0 : index
    %c0_1 = arith.constant 0 : index
    %0 = vector.load %arg1[%c0, %c0_0, %c0_1] : memref<1x16x9xf32, #tpu.memory_space<vmem>>, vector<1x16x9xf32>
    %1 = vector.shape_cast %0 : vector<1x16x9xf32> to vector<16x9xf32>
    %c0_2 = arith.constant 0 : index
    %c0_3 = arith.constant 0 : index
    %c0_4 = arith.constant 0 : index
    %2 = vector.load %arg2[%c0_2, %c0_3, %c0_4] : memref<1x16x16xf32, #tpu.memory_space<vmem>>, vector<1x16x16xf32>
    %3 = vector.shape_cast %2 : vector<1x16x16xf32> to vector<16x16xf32>
    %c0_5 = arith.constant 0 : index
    %c0_6 = arith.constant 0 : index
    %4 = vector.load %arg5[%c0_5, %c0_6] : memref<8x32xf32, #tpu.memory_space<vmem>>, vector<8x32xf32>
    %c0_7 = arith.constant 0 : index
    %c0_8 = arith.constant 0 : index
    %c0_9 = arith.constant 0 : index
    %5 = vector.load %arg3[%c0_7, %c0_8, %c0_9] : memref<2x9x32xf32, #tpu.memory_space<vmem>>, vector<1x9x32xf32>
    %6 = vector.shape_cast %5 : vector<1x9x32xf32> to vector<9x32xf32>
    %c1 = arith.constant 1 : index
    %c0_10 = arith.constant 0 : index
    %c0_11 = arith.constant 0 : index
    %7 = vector.load %arg3[%c1, %c0_10, %c0_11] : memref<2x9x32xf32, #tpu.memory_space<vmem>>, vector<1x9x32xf32>
    %8 = vector.shape_cast %7 : vector<1x9x32xf32> to vector<9x32xf32>
    %9 = vector.extract_strided_slice %4 {offsets = [0, 0], sizes = [1, 32], strides = [1, 1]} : vector<8x32xf32> to vector<1x32xf32>
    %10 = vector.extract_strided_slice %4 {offsets = [1, 0], sizes = [1, 32], strides = [1, 1]} : vector<8x32xf32> to vector<1x32xf32>
    %cst = arith.constant dense<0.000000e+00> : vector<16x32xf32>
    %11 = tpu.matmul %1, %6, %cst {dimension_numbers = #tpu.dot_dimension_numbers<[1], [0], [0], [1], [0, 0, 1, 1], [], []>} : vector<16x9xf32>, vector<9x32xf32>, vector<16x32xf32> -> vector<16x32xf32>
    %cst_12 = arith.constant dense<0.000000e+00> : vector<16x32xf32>
    %12 = tpu.matmul %1, %8, %cst_12 {dimension_numbers = #tpu.dot_dimension_numbers<[1], [0], [0], [1], [0, 0, 1, 1], [], []>} : vector<16x9xf32>, vector<9x32xf32>, vector<16x32xf32> -> vector<16x32xf32>
    %13 = vector.extract_strided_slice %12 {offsets = [0, 0], sizes = [8, 32], strides = [1, 1]} : vector<16x32xf32> to vector<8x32xf32>
    %14 = vector.extract_strided_slice %3 {offsets = [0, 0], sizes = [8, 16], strides = [1, 1]} : vector<16x16xf32> to vector<8x16xf32>
    %15 = vector.shape_cast %13 : vector<8x32xf32> to vector<8x1x32xf32>
    %16 = vector.shape_cast %11 : vector<16x32xf32> to vector<1x16x32xf32>
    %17 = vector.broadcast %15 : vector<8x1x32xf32> to vector<8x16x32xf32>
    %18 = vector.broadcast %16 : vector<1x16x32xf32> to vector<8x16x32xf32>
    %19 = arith.addf %17, %18 : vector<8x16x32xf32>
    %cst_13 = arith.constant 0.000000e+00 : f32
    %20 = vector.broadcast %cst_13 : f32 to vector<8x16x32xf32>
    %21 = arith.cmpf ogt, %19, %20 : vector<8x16x32xf32>
    %cst_14 = arith.constant 2.000000e-01 : f32
    %22 = vector.broadcast %cst_14 : f32 to vector<8x16x32xf32>
    %23 = arith.mulf %22, %19 : vector<8x16x32xf32>
    %24 = arith.select %21, %19, %23 : vector<8x16x32xi1>, vector<8x16x32xf32>
    %25 = vector.shape_cast %9 : vector<1x32xf32> to vector<1x1x32xf32>
    %26 = vector.broadcast %25 : vector<1x1x32xf32> to vector<8x16x32xf32>
    %27 = arith.mulf %24, %26 : vector<8x16x32xf32>
    %cst_15 = arith.constant dense<0.000000e+00> : vector<8x16xf32>
    %28 = vector.multi_reduction <add>, %27, %cst_15 [2] : vector<8x16x32xf32> to vector<8x16xf32>
    %cst_16 = arith.constant 0.000000e+00 : f32
    %29 = vector.broadcast %cst_16 : f32 to vector<8x16xf32>
    %30 = arith.cmpf ogt, %14, %29 : vector<8x16xf32>
    %cst_17 = arith.constant -1.000000e+30 : f32
    %31 = vector.broadcast %cst_17 : f32 to vector<8x16xf32>
    %32 = arith.select %30, %28, %31 : vector<8x16xi1>, vector<8x16xf32>
    %cst_18 = arith.constant dense<0xFF800000> : vector<8xf32>
    %33 = vector.multi_reduction <maximumf>, %32, %cst_18 [1] : vector<8x16xf32> to vector<8xf32>
    %34 = vector.shape_cast %33 : vector<8xf32> to vector<8x1xf32>
    %35 = vector.broadcast %34 : vector<8x1xf32> to vector<8x16xf32>
    %36 = arith.subf %32, %35 : vector<8x16xf32>
    %37 = math.exp %36 : vector<8x16xf32>
    %38 = arith.mulf %37, %14 : vector<8x16xf32>
    %cst_19 = arith.constant dense<0.000000e+00> : vector<8xf32>
    %39 = vector.multi_reduction <add>, %38, %cst_19 [1] : vector<8x16xf32> to vector<8xf32>
    %40 = vector.shape_cast %39 : vector<8xf32> to vector<8x1xf32>
    %41 = vector.broadcast %40 : vector<8x1xf32> to vector<8x16xf32>
    %42 = arith.divf %38, %41 : vector<8x16xf32>
    %cst_20 = arith.constant dense<0.000000e+00> : vector<8x32xf32>
    %43 = tpu.matmul %42, %11, %cst_20 {dimension_numbers = #tpu.dot_dimension_numbers<[1], [0], [0], [1], [0, 0, 1, 1], [], []>} : vector<8x16xf32>, vector<16x32xf32>, vector<8x32xf32> -> vector<8x32xf32>
    %44 = vector.extract_strided_slice %12 {offsets = [8, 0], sizes = [8, 32], strides = [1, 1]} : vector<16x32xf32> to vector<8x32xf32>
    %45 = vector.extract_strided_slice %3 {offsets = [8, 0], sizes = [8, 16], strides = [1, 1]} : vector<16x16xf32> to vector<8x16xf32>
    %46 = vector.shape_cast %44 : vector<8x32xf32> to vector<8x1x32xf32>
    %47 = vector.shape_cast %11 : vector<16x32xf32> to vector<1x16x32xf32>
    %48 = vector.broadcast %46 : vector<8x1x32xf32> to vector<8x16x32xf32>
    %49 = vector.broadcast %47 : vector<1x16x32xf32> to vector<8x16x32xf32>
    %50 = arith.addf %48, %49 : vector<8x16x32xf32>
    %cst_21 = arith.constant 0.000000e+00 : f32
    %51 = vector.broadcast %cst_21 : f32 to vector<8x16x32xf32>
    %52 = arith.cmpf ogt, %50, %51 : vector<8x16x32xf32>
    %cst_22 = arith.constant 2.000000e-01 : f32
    %53 = vector.broadcast %cst_22 : f32 to vector<8x16x32xf32>
    %54 = arith.mulf %53, %50 : vector<8x16x32xf32>
    %55 = arith.select %52, %50, %54 : vector<8x16x32xi1>, vector<8x16x32xf32>
    %56 = vector.shape_cast %9 : vector<1x32xf32> to vector<1x1x32xf32>
    %57 = vector.broadcast %56 : vector<1x1x32xf32> to vector<8x16x32xf32>
    %58 = arith.mulf %55, %57 : vector<8x16x32xf32>
    %cst_23 = arith.constant dense<0.000000e+00> : vector<8x16xf32>
    %59 = vector.multi_reduction <add>, %58, %cst_23 [2] : vector<8x16x32xf32> to vector<8x16xf32>
    %cst_24 = arith.constant 0.000000e+00 : f32
    %60 = vector.broadcast %cst_24 : f32 to vector<8x16xf32>
    %61 = arith.cmpf ogt, %45, %60 : vector<8x16xf32>
    %cst_25 = arith.constant -1.000000e+30 : f32
    %62 = vector.broadcast %cst_25 : f32 to vector<8x16xf32>
    %63 = arith.select %61, %59, %62 : vector<8x16xi1>, vector<8x16xf32>
    %cst_26 = arith.constant dense<0xFF800000> : vector<8xf32>
    %64 = vector.multi_reduction <maximumf>, %63, %cst_26 [1] : vector<8x16xf32> to vector<8xf32>
    %65 = vector.shape_cast %64 : vector<8xf32> to vector<8x1xf32>
    %66 = vector.broadcast %65 : vector<8x1xf32> to vector<8x16xf32>
    %67 = arith.subf %63, %66 : vector<8x16xf32>
    %68 = math.exp %67 : vector<8x16xf32>
    %69 = arith.mulf %68, %45 : vector<8x16xf32>
    %cst_27 = arith.constant dense<0.000000e+00> : vector<8xf32>
    %70 = vector.multi_reduction <add>, %69, %cst_27 [1] : vector<8x16xf32> to vector<8xf32>
    %71 = vector.shape_cast %70 : vector<8xf32> to vector<8x1xf32>
    %72 = vector.broadcast %71 : vector<8x1xf32> to vector<8x16xf32>
    %73 = arith.divf %69, %72 : vector<8x16xf32>
    %cst_28 = arith.constant dense<0.000000e+00> : vector<8x32xf32>
    %74 = tpu.matmul %73, %11, %cst_28 {dimension_numbers = #tpu.dot_dimension_numbers<[1], [0], [0], [1], [0, 0, 1, 1], [], []>} : vector<8x16xf32>, vector<16x32xf32>, vector<8x32xf32> -> vector<8x32xf32>
    %75 = tpu.concatenate %43, %74 in 0 : vector<8x32xf32>, vector<8x32xf32> -> vector<16x32xf32>
    %76 = tpu.concatenate %42, %73 in 0 : vector<8x16xf32>, vector<8x16xf32> -> vector<16x16xf32>
    %77 = vector.broadcast %10 : vector<1x32xf32> to vector<16x32xf32>
    %78 = arith.addf %75, %77 : vector<16x32xf32>
    %c0_29 = arith.constant 0 : index
    %c0_30 = arith.constant 0 : index
    %c0_31 = arith.constant 0 : index
    %79 = vector.load %arg8[%c0_29, %c0_30, %c0_31] : memref<1x16x16xf32, #tpu.memory_space<vmem>>, vector<1x16x16xf32>
    %80 = vector.shape_cast %79 : vector<1x16x16xf32> to vector<16x16xf32>
    %81 = vector.shape_cast %76 : vector<16x16xf32> to vector<1x16x16xf32>
    tpu.vector_store %arg8[%c0_29, %c0_30, %c0_31], %81 {strides = array<i32>} : memref<1x16x16xf32, #tpu.memory_space<vmem>>, vector<1x16x16xf32>,
    %c0_32 = arith.constant 0 : index
    %c0_33 = arith.constant 0 : index
    %c0_34 = arith.constant 0 : index
    %82 = vector.load %arg4[%c0_32, %c0_33, %c0_34] : memref<2x32x32xf32, #tpu.memory_space<vmem>>, vector<1x32x32xf32>
    %83 = vector.shape_cast %82 : vector<1x32x32xf32> to vector<32x32xf32>
    %c1_35 = arith.constant 1 : index
    %c0_36 = arith.constant 0 : index
    %c0_37 = arith.constant 0 : index
    %84 = vector.load %arg4[%c1_35, %c0_36, %c0_37] : memref<2x32x32xf32, #tpu.memory_space<vmem>>, vector<1x32x32xf32>
    %85 = vector.shape_cast %84 : vector<1x32x32xf32> to vector<32x32xf32>
    %86 = vector.extract_strided_slice %4 {offsets = [2, 0], sizes = [1, 32], strides = [1, 1]} : vector<8x32xf32> to vector<1x32xf32>
    %87 = vector.extract_strided_slice %4 {offsets = [3, 0], sizes = [1, 32], strides = [1, 1]} : vector<8x32xf32> to vector<1x32xf32>
    %88 = vector.extract_strided_slice %4 {offsets = [4, 0], sizes = [1, 32], strides = [1, 1]} : vector<8x32xf32> to vector<1x32xf32>
    %89 = vector.extract_strided_slice %4 {offsets = [5, 0], sizes = [1, 32], strides = [1, 1]} : vector<8x32xf32> to vector<1x32xf32>
    %cst_38 = arith.constant dense<0.000000e+00> : vector<16x32xf32>
    %90 = tpu.matmul %78, %83, %cst_38 {dimension_numbers = #tpu.dot_dimension_numbers<[1], [0], [0], [1], [0, 0, 1, 1], [], []>} : vector<16x32xf32>, vector<32x32xf32>, vector<16x32xf32> -> vector<16x32xf32>
    %cst_39 = arith.constant dense<0.000000e+00> : vector<16x32xf32>
    %91 = tpu.matmul %78, %85, %cst_39 {dimension_numbers = #tpu.dot_dimension_numbers<[1], [0], [0], [1], [0, 0, 1, 1], [], []>} : vector<16x32xf32>, vector<32x32xf32>, vector<16x32xf32> -> vector<16x32xf32>
    %92 = vector.broadcast %86 : vector<1x32xf32> to vector<16x32xf32>
    %93 = arith.addf %90, %92 : vector<16x32xf32>
    %94 = vector.broadcast %87 : vector<1x32xf32> to vector<16x32xf32>
    %95 = arith.addf %91, %94 : vector<16x32xf32>
    %96 = vector.extract_strided_slice %95 {offsets = [0, 0], sizes = [8, 32], strides = [1, 1]} : vector<16x32xf32> to vector<8x32xf32>
    %97 = vector.extract_strided_slice %3 {offsets = [0, 0], sizes = [8, 16], strides = [1, 1]} : vector<16x16xf32> to vector<8x16xf32>
    %98 = vector.shape_cast %96 : vector<8x32xf32> to vector<8x1x32xf32>
    %99 = vector.shape_cast %93 : vector<16x32xf32> to vector<1x16x32xf32>
    %100 = vector.broadcast %98 : vector<8x1x32xf32> to vector<8x16x32xf32>
    %101 = vector.broadcast %99 : vector<1x16x32xf32> to vector<8x16x32xf32>
    %102 = arith.addf %100, %101 : vector<8x16x32xf32>
    %cst_40 = arith.constant 0.000000e+00 : f32
    %103 = vector.broadcast %cst_40 : f32 to vector<8x16x32xf32>
    %104 = arith.cmpf ogt, %102, %103 : vector<8x16x32xf32>
    %cst_41 = arith.constant 2.000000e-01 : f32
    %105 = vector.broadcast %cst_41 : f32 to vector<8x16x32xf32>
    %106 = arith.mulf %105, %102 : vector<8x16x32xf32>
    %107 = arith.select %104, %102, %106 : vector<8x16x32xi1>, vector<8x16x32xf32>
    %108 = vector.shape_cast %88 : vector<1x32xf32> to vector<1x1x32xf32>
    %109 = vector.broadcast %108 : vector<1x1x32xf32> to vector<8x16x32xf32>
    %110 = arith.mulf %107, %109 : vector<8x16x32xf32>
    %cst_42 = arith.constant dense<0.000000e+00> : vector<8x16xf32>
    %111 = vector.multi_reduction <add>, %110, %cst_42 [2] : vector<8x16x32xf32> to vector<8x16xf32>
    %cst_43 = arith.constant 0.000000e+00 : f32
    %112 = vector.broadcast %cst_43 : f32 to vector<8x16xf32>
    %113 = arith.cmpf ogt, %97, %112 : vector<8x16xf32>
    %cst_44 = arith.constant -1.000000e+30 : f32
    %114 = vector.broadcast %cst_44 : f32 to vector<8x16xf32>
    %115 = arith.select %113, %111, %114 : vector<8x16xi1>, vector<8x16xf32>
    %cst_45 = arith.constant dense<0xFF800000> : vector<8xf32>
    %116 = vector.multi_reduction <maximumf>, %115, %cst_45 [1] : vector<8x16xf32> to vector<8xf32>
    %117 = vector.shape_cast %116 : vector<8xf32> to vector<8x1xf32>
    %118 = vector.broadcast %117 : vector<8x1xf32> to vector<8x16xf32>
    %119 = arith.subf %115, %118 : vector<8x16xf32>
    %120 = math.exp %119 : vector<8x16xf32>
    %121 = arith.mulf %120, %97 : vector<8x16xf32>
    %cst_46 = arith.constant dense<0.000000e+00> : vector<8xf32>
    %122 = vector.multi_reduction <add>, %121, %cst_46 [1] : vector<8x16xf32> to vector<8xf32>
    %123 = vector.shape_cast %122 : vector<8xf32> to vector<8x1xf32>
    %124 = vector.broadcast %123 : vector<8x1xf32> to vector<8x16xf32>
    %125 = arith.divf %121, %124 : vector<8x16xf32>
    %cst_47 = arith.constant dense<0.000000e+00> : vector<8x32xf32>
    %126 = tpu.matmul %125, %93, %cst_47 {dimension_numbers = #tpu.dot_dimension_numbers<[1], [0], [0], [1], [0, 0, 1, 1], [], []>} : vector<8x16xf32>, vector<16x32xf32>, vector<8x32xf32> -> vector<8x32xf32>
    %127 = vector.extract_strided_slice %95 {offsets = [8, 0], sizes = [8, 32], strides = [1, 1]} : vector<16x32xf32> to vector<8x32xf32>
    %128 = vector.extract_strided_slice %3 {offsets = [8, 0], sizes = [8, 16], strides = [1, 1]} : vector<16x16xf32> to vector<8x16xf32>
    %129 = vector.shape_cast %127 : vector<8x32xf32> to vector<8x1x32xf32>
    %130 = vector.shape_cast %93 : vector<16x32xf32> to vector<1x16x32xf32>
    %131 = vector.broadcast %129 : vector<8x1x32xf32> to vector<8x16x32xf32>
    %132 = vector.broadcast %130 : vector<1x16x32xf32> to vector<8x16x32xf32>
    %133 = arith.addf %131, %132 : vector<8x16x32xf32>
    %cst_48 = arith.constant 0.000000e+00 : f32
    %134 = vector.broadcast %cst_48 : f32 to vector<8x16x32xf32>
    %135 = arith.cmpf ogt, %133, %134 : vector<8x16x32xf32>
    %cst_49 = arith.constant 2.000000e-01 : f32
    %136 = vector.broadcast %cst_49 : f32 to vector<8x16x32xf32>
    %137 = arith.mulf %136, %133 : vector<8x16x32xf32>
    %138 = arith.select %135, %133, %137 : vector<8x16x32xi1>, vector<8x16x32xf32>
    %139 = vector.shape_cast %88 : vector<1x32xf32> to vector<1x1x32xf32>
    %140 = vector.broadcast %139 : vector<1x1x32xf32> to vector<8x16x32xf32>
    %141 = arith.mulf %138, %140 : vector<8x16x32xf32>
    %cst_50 = arith.constant dense<0.000000e+00> : vector<8x16xf32>
    %142 = vector.multi_reduction <add>, %141, %cst_50 [2] : vector<8x16x32xf32> to vector<8x16xf32>
    %cst_51 = arith.constant 0.000000e+00 : f32
    %143 = vector.broadcast %cst_51 : f32 to vector<8x16xf32>
    %144 = arith.cmpf ogt, %128, %143 : vector<8x16xf32>
    %cst_52 = arith.constant -1.000000e+30 : f32
    %145 = vector.broadcast %cst_52 : f32 to vector<8x16xf32>
    %146 = arith.select %144, %142, %145 : vector<8x16xi1>, vector<8x16xf32>
    %cst_53 = arith.constant dense<0xFF800000> : vector<8xf32>
    %147 = vector.multi_reduction <maximumf>, %146, %cst_53 [1] : vector<8x16xf32> to vector<8xf32>
    %148 = vector.shape_cast %147 : vector<8xf32> to vector<8x1xf32>
    %149 = vector.broadcast %148 : vector<8x1xf32> to vector<8x16xf32>
    %150 = arith.subf %146, %149 : vector<8x16xf32>
    %151 = math.exp %150 : vector<8x16xf32>
    %152 = arith.mulf %151, %128 : vector<8x16xf32>
    %cst_54 = arith.constant dense<0.000000e+00> : vector<8xf32>
    %153 = vector.multi_reduction <add>, %152, %cst_54 [1] : vector<8x16xf32> to vector<8xf32>
    %154 = vector.shape_cast %153 : vector<8xf32> to vector<8x1xf32>
    %155 = vector.broadcast %154 : vector<8x1xf32> to vector<8x16xf32>
    %156 = arith.divf %152, %155 : vector<8x16xf32>
    %cst_55 = arith.constant dense<0.000000e+00> : vector<8x32xf32>
    %157 = tpu.matmul %156, %93, %cst_55 {dimension_numbers = #tpu.dot_dimension_numbers<[1], [0], [0], [1], [0, 0, 1, 1], [], []>} : vector<8x16xf32>, vector<16x32xf32>, vector<8x32xf32> -> vector<8x32xf32>
    %158 = tpu.concatenate %126, %157 in 0 : vector<8x32xf32>, vector<8x32xf32> -> vector<16x32xf32>
    %159 = vector.broadcast %89 : vector<1x32xf32> to vector<16x32xf32>
    %160 = arith.addf %158, %159 : vector<16x32xf32>
    %161 = arith.index_cast %arg0 : i32 to index
    %162 = memref.load %arg6[%161] : memref<4xf32, #tpu.memory_space<smem>>
    %163 = vector.extract_strided_slice %4 {offsets = [6, 0], sizes = [1, 32], strides = [1, 1]} : vector<8x32xf32> to vector<1x32xf32>
    %164 = vector.broadcast %162 : f32 to vector<1x32xf32>
    %165 = arith.mulf %164, %163 : vector<1x32xf32>
    %166 = vector.extract_strided_slice %4 {offsets = [7, 0], sizes = [1, 32], strides = [1, 1]} : vector<8x32xf32> to vector<1x32xf32>
    %167 = arith.addf %165, %166 : vector<1x32xf32>
    %168 = vector.broadcast %167 : vector<1x32xf32> to vector<16x32xf32>
    %169 = arith.addf %160, %168 : vector<16x32xf32>
    %c0_56 = arith.constant 0 : index
    %c0_57 = arith.constant 0 : index
    %c0_58 = arith.constant 0 : index
    %170 = vector.load %arg7[%c0_56, %c0_57, %c0_58] : memref<1x16x32xf32, #tpu.memory_space<vmem>>, vector<1x16x32xf32>
    %171 = vector.shape_cast %170 : vector<1x16x32xf32> to vector<16x32xf32>
    %172 = vector.shape_cast %169 : vector<16x32xf32> to vector<1x16x32xf32>
    tpu.vector_store %arg7[%c0_56, %c0_57, %c0_58], %172 {strides = array<i32>} : memref<1x16x32xf32, #tpu.memory_space<vmem>>, vector<1x16x32xf32>,
    return
  }
  func.func @transform_0(%arg0: i32) -> (i32, i32, i32) {
    %c0_i32 = arith.constant 0 : i32
    %c0_i32_0 = arith.constant 0 : i32
    %c0_i32_1 = arith.constant 0 : i32
    return %arg0, %c0_i32, %c0_i32_0 : i32, i32, i32
  }
  func.func @transform_1(%arg0: i32) -> (i32, i32, i32) {
    %c0_i32 = arith.constant 0 : i32
    %c0_i32_0 = arith.constant 0 : i32
    %c0_i32_1 = arith.constant 0 : i32
    return %arg0, %c0_i32, %c0_i32_0 : i32, i32, i32
  }
  func.func @transform_2(%arg0: i32) -> (i32, i32, i32) {
    %c0_i32 = arith.constant 0 : i32
    %c0_i32_0 = arith.constant 0 : i32
    %c0_i32_1 = arith.constant 0 : i32
    %c0_i32_2 = arith.constant 0 : i32
    return %c0_i32, %c0_i32_0, %c0_i32_1 : i32, i32, i32
  }
  func.func @transform_3(%arg0: i32) -> (i32, i32, i32) {
    %c0_i32 = arith.constant 0 : i32
    %c0_i32_0 = arith.constant 0 : i32
    %c0_i32_1 = arith.constant 0 : i32
    %c0_i32_2 = arith.constant 0 : i32
    return %c0_i32, %c0_i32_0, %c0_i32_1 : i32, i32, i32
  }
  func.func @transform_4(%arg0: i32) -> (i32, i32) {
    %c0_i32 = arith.constant 0 : i32
    %c0_i32_0 = arith.constant 0 : i32
    %c0_i32_1 = arith.constant 0 : i32
    return %c0_i32, %c0_i32_0 : i32, i32
  }
  func.func @transform_5(%arg0: i32) -> i32 {
    %c0_i32 = arith.constant 0 : i32
    %c0_i32_0 = arith.constant 0 : i32
    return %c0_i32 : i32
  }
  func.func @transform_6(%arg0: i32) -> (i32, i32, i32) {
    %c0_i32 = arith.constant 0 : i32
    %c0_i32_0 = arith.constant 0 : i32
    %c0_i32_1 = arith.constant 0 : i32
    return %arg0, %c0_i32, %c0_i32_0 : i32, i32, i32
  }
  func.func @transform_7(%arg0: i32) -> (i32, i32, i32) {
    %c0_i32 = arith.constant 0 : i32
    %c0_i32_0 = arith.constant 0 : i32
    %c0_i32_1 = arith.constant 0 : i32
    return %arg0, %c0_i32, %c0_i32_0 : i32, i32, i32
  }
}

</mosaic_0001>

<llo_original>
// kernel: tpu_custom_call.1
$region0: #{tpu_custom_call.1}
  #allocation0 [shape = 'u32[]', space=smem, size = 0x4, offset = 0x4, fixed_abs, tag = 'smem constant byte address 0x4 - core index']
  #allocation1 [shape = 'u32[144,128]{1,0:T(1,128)}', space=vmem, size = 0x12000, scoped, tag = 'internal scratch']
  %s0 = inlined_call_operand.vmem [shape: f32[4,16,9], index: 0, kind: input, shape index: {}]
  %s1 = inlined_call_operand.vmem [shape: f32[4,16,16], index: 1, kind: input, shape index: {}]
  %s2 = inlined_call_operand.vmem [shape: f32[2,9,32], index: 2, kind: input, shape index: {}]
  %s3 = inlined_call_operand.vmem [shape: f32[2,32,32], index: 3, kind: input, shape index: {}]
  %s4 = inlined_call_operand.vmem [shape: f32[8,32], index: 4, kind: input, shape index: {}]
  %s5 = inlined_call_operand.vmem [shape: f32[4], index: 5, kind: input, shape index: {}]
  %s6 = inlined_call_operand.hbm [shape: f32[4,16,32], index: 6, kind: output, shape index: {0}]
  %s7 = inlined_call_operand.hbm [shape: f32[4,16,16], index: 7, kind: output, shape index: {1}]
  %8 = xla_tuple %s6, %s7
  %s9 = sld [smem:[#allocation0]]
  $region69: #{tpu_custom_call.1} parent=0
    _
  %s11 = ssub.s32 1, %s9
  %s12 = scalar_select 0, %s11, %s9
  $region1: #{tpu_custom_call.1} parent=0
    #allocation2 [shape = 'u8[512]{0}', space=smem, size = 0x200, scoped, tag = 'input window, operand 5, single buffered']
    #allocation3 [shape = 's32[2]{0}', space=sflag, size = 0x8, scoped, tag = 'scoped memory for tpu_custom_call.1']
    #allocation4 [shape = 's32[2]{0}', space=sflag, size = 0x8, scoped, tag = 'scoped memory for tpu_custom_call.1']
    #allocation5 [shape = 'u8[16384]{0}', space=vmem, size = 0x4000, scoped, tag = 'output window, operand 0']
    #allocation6 [shape = 'u8[16384]{0}', space=vmem, size = 0x4000, scoped, tag = 'output window, operand 1']
    #allocation7 [shape = 's32[2]{0}', space=sflag, size = 0x8, scoped, tag = 'scoped memory for tpu_custom_call.1']
    %13 = vsyncpa [#allocation4], 0
    %14 = vsyncpa [#allocation3], 0
    %s15 = scalar_lea.sflag [#allocation3], 1
    %16 = vsyncpa %s15, 0
    %17 = vsyncpa [#allocation7], 0
    %s18 = scalar_lea.sflag [#allocation7], 1
    %19 = vsyncpa %s18, 0
    loop: start=0, step=1, limit=6
    $region2: #{tpu_custom_call.1} parent=1 // loop_pre_header
      _
    $region3: #{tpu_custom_call.1} parent=1 // loop_header
      %s21 = sphi 0, %s25
      %p22 = scmp.ge.s32.totalorder %s21, 6
      %s31 = sphi 0, %s33
      %s34 = sphi 0, %s31
      %s35 = sphi 0, %s34
      %s51 = sphi 0, %s35
      %s57 = sphi 0, %s59
      %s60 = sphi 0, %s57
      %s61 = sphi 0, %s60
      %s77 = sphi 0, %s61
      %s81 = sphi 0, %s81
      %s83 = sphi 0, %s81
      %s84 = sphi 0, %s83
      %s98 = sphi 0, %s84
      %s102 = sphi 0, %s102
      %s104 = sphi 0, %s102
      %s105 = sphi 0, %s104
      %s119 = sphi 0, %s105
      %s123 = sphi 0, %s123
      %s125 = sphi 0, %s123
      %s126 = sphi 0, %s125
      %s140 = sphi 0, %s126
      %s144 = sphi 0, %s144
      %s146 = sphi 0, %s144
      %s147 = sphi 0, %s146
      %s161 = sphi 0, %s147
      %s167 = sphi 0, %s169
      %s170 = sphi 0, %s167
      %s171 = sphi 0, %s170
      %s187 = sphi 0, %s171
      %s193 = sphi 0, %s195
      %s196 = sphi 0, %s193
      %s197 = sphi 0, %s196
      %s213 = sphi 0, %s197
    $region4: #{tpu_custom_call.1} parent=1 // loop_header_branch
      %24 = sbr.rel (%p22) target = $region8
    $region5: #{tpu_custom_call.1} parent=1 // loop_body
      %s26 = ssub.s32 %s21, 1
      %s27 = ssub.s32 %s21, 2
      %s28 = sadd.s32 %s21, 1
      %s29 = ssub.s32 %s21, %s28
      %p30 = scmp.eq.s32.totalorder %s29, 0
      %s32 = sadd.s32 %s31, 1
      %s33 = scalar_select %p30, %s31, %s32
      %p36 = pneg %p30
      %p37 = scmp.eq.s32.totalorder %s21, 3
      %p38 = por %p36, %p37
      %p39 = scmp.ne.s32.totalorder %s31, %s34
      %p40 = scmp.eq.s32.totalorder %s21, 0
      %p41 = por %p39, %p40
      %p42 = scmp.ne.s32.totalorder %s31, %s34
      %p43 = scmp.eq.s32.totalorder %s26, 3
      %p44 = por %p42, %p43
      %p45 = scmp.ne.s32.totalorder %s34, %s35
      %p46 = scmp.eq.s32.totalorder %s26, 0
      %p47 = por %p45, %p46
      %p48 = scmp.ne.s32.totalorder %s34, %s35
      %p49 = scmp.eq.s32.totalorder %s27, 3
      %p50 = por %p48, %p49
      %p52 = scmp.ne.s32.totalorder %s35, %s51
      %p53 = scmp.eq.s32.totalorder %s27, 0
      %p54 = por %p52, %p53
      %s55 = ssub.s32 %s21, %s28
      %p56 = scmp.eq.s32.totalorder %s55, 0
      %s58 = sadd.s32 %s57, 1
      %s59 = scalar_select %p56, %s57, %s58
      %p62 = pneg %p56
      %p63 = scmp.eq.s32.totalorder %s21, 3
      %p64 = por %p62, %p63
      %p65 = scmp.ne.s32.totalorder %s57, %s60
      %p66 = scmp.eq.s32.totalorder %s21, 0
      %p67 = por %p65, %p66
      %p68 = scmp.ne.s32.totalorder %s57, %s60
      %p69 = scmp.eq.s32.totalorder %s26, 3
      %p70 = por %p68, %p69
      %p71 = scmp.ne.s32.totalorder %s60, %s61
      %p72 = scmp.eq.s32.totalorder %s26, 0
      %p73 = por %p71, %p72
      %p74 = scmp.ne.s32.totalorder %s60, %s61
      %p75 = scmp.eq.s32.totalorder %s27, 3
      %p76 = por %p74, %p75
      %p78 = scmp.ne.s32.totalorder %s61, %s77
      %p79 = scmp.eq.s32.totalorder %s27, 0
      %p80 = por %p78, %p79
      %s82 = sadd.s32 %s81, 1
      %p85 = scmp.eq.s32.totalorder %s21, 3
      %p86 = scmp.ne.s32.totalorder %s81, %s83
      %p87 = scmp.eq.s32.totalorder %s21, 0
      %p88 = por %p86, %p87
      %p89 = scmp.ne.s32.totalorder %s81, %s83
      %p90 = scmp.eq.s32.totalorder %s26, 3
      %p91 = por %p89, %p90
      %p92 = scmp.ne.s32.totalorder %s83, %s84
      %p93 = scmp.eq.s32.totalorder %s26, 0
      %p94 = por %p92, %p93
      %p95 = scmp.ne.s32.totalorder %s83, %s84
      %p96 = scmp.eq.s32.totalorder %s27, 3
      %p97 = por %p95, %p96
      %p99 = scmp.ne.s32.totalorder %s84, %s98
      %p100 = scmp.eq.s32.totalorder %s27, 0
      %p101 = por %p99, %p100
      %s103 = sadd.s32 %s102, 1
      %p106 = scmp.eq.s32.totalorder %s21, 3
      %p107 = scmp.ne.s32.totalorder %s102, %s104
      %p108 = scmp.eq.s32.totalorder %s21, 0
      %p109 = por %p107, %p108
      %p110 = scmp.ne.s32.totalorder %s102, %s104
      %p111 = scmp.eq.s32.totalorder %s26, 3
      %p112 = por %p110, %p111
      %p113 = scmp.ne.s32.totalorder %s104, %s105
      %p114 = scmp.eq.s32.totalorder %s26, 0
      %p115 = por %p113, %p114
      %p116 = scmp.ne.s32.totalorder %s104, %s105
      %p117 = scmp.eq.s32.totalorder %s27, 3
      %p118 = por %p116, %p117
      %p120 = scmp.ne.s32.totalorder %s105, %s119
      %p121 = scmp.eq.s32.totalorder %s27, 0
      %p122 = por %p120, %p121
      %s124 = sadd.s32 %s123, 1
      %p127 = scmp.eq.s32.totalorder %s21, 3
      %p128 = scmp.ne.s32.totalorder %s123, %s125
      %p129 = scmp.eq.s32.totalorder %s21, 0
      %p130 = por %p128, %p129
      %p131 = scmp.ne.s32.totalorder %s123, %s125
      %p132 = scmp.eq.s32.totalorder %s26, 3
      %p133 = por %p131, %p132
      %p134 = scmp.ne.s32.totalorder %s125, %s126
      %p135 = scmp.eq.s32.totalorder %s26, 0
      %p136 = por %p134, %p135
      %p137 = scmp.ne.s32.totalorder %s125, %s126
      %p138 = scmp.eq.s32.totalorder %s27, 3
      %p139 = por %p137, %p138
      %p141 = scmp.ne.s32.totalorder %s126, %s140
      %p142 = scmp.eq.s32.totalorder %s27, 0
      %p143 = por %p141, %p142
      %s145 = sadd.s32 %s144, 1
      %p148 = scmp.eq.s32.totalorder %s21, 3
      %p149 = scmp.ne.s32.totalorder %s144, %s146
      %p150 = scmp.eq.s32.totalorder %s21, 0
      %p151 = por %p149, %p150
      %p152 = scmp.ne.s32.totalorder %s144, %s146
      %p153 = scmp.eq.s32.totalorder %s26, 3
      %p154 = por %p152, %p153
      %p155 = scmp.ne.s32.totalorder %s146, %s147
      %p156 = scmp.eq.s32.totalorder %s26, 0
      %p157 = por %p155, %p156
      %p158 = scmp.ne.s32.totalorder %s146, %s147
      %p159 = scmp.eq.s32.totalorder %s27, 3
      %p160 = por %p158, %p159
      %p162 = scmp.ne.s32.totalorder %s147, %s161
      %p163 = scmp.eq.s32.totalorder %s27, 0
      %p164 = por %p162, %p163
      %s165 = ssub.s32 %s21, %s28
      %p166 = scmp.eq.s32.totalorder %s165, 0
      %s168 = sadd.s32 %s167, 1
      %s169 = scalar_select %p166, %s167, %s168
      %p172 = pneg %p166
      %p173 = scmp.eq.s32.totalorder %s21, 3
      %p174 = por %p172, %p173
      %p175 = scmp.ne.s32.totalorder %s167, %s170
      %p176 = scmp.eq.s32.totalorder %s21, 0
      %p177 = por %p175, %p176
      %p178 = scmp.ne.s32.totalorder %s167, %s170
      %p179 = scmp.eq.s32.totalorder %s26, 3
      %p180 = por %p178, %p179
      %p181 = scmp.ne.s32.totalorder %s170, %s171
      %p182 = scmp.eq.s32.totalorder %s26, 0
      %p183 = por %p181, %p182
      %p184 = scmp.ne.s32.totalorder %s170, %s171
      %p185 = scmp.eq.s32.totalorder %s27, 3
      %p186 = por %p184, %p185
      %p188 = scmp.ne.s32.totalorder %s171, %s187
      %p189 = scmp.eq.s32.totalorder %s27, 0
      %p190 = por %p188, %p189
      %s191 = ssub.s32 %s21, %s28
      %p192 = scmp.eq.s32.totalorder %s191, 0
      %s194 = sadd.s32 %s193, 1
      %s195 = scalar_select %p192, %s193, %s194
      %p198 = pneg %p192
      %p199 = scmp.eq.s32.totalorder %s21, 3
      %p200 = por %p198, %p199
      %p201 = scmp.ne.s32.totalorder %s193, %s196
      %p202 = scmp.eq.s32.totalorder %s21, 0
      %p203 = por %p201, %p202
      %p204 = scmp.ne.s32.totalorder %s193, %s196
      %p205 = scmp.eq.s32.totalorder %s26, 3
      %p206 = por %p204, %p205
      %p207 = scmp.ne.s32.totalorder %s196, %s197
      %p208 = scmp.eq.s32.totalorder %s26, 0
      %p209 = por %p207, %p208
      %p210 = scmp.ne.s32.totalorder %s196, %s197
      %p211 = scmp.eq.s32.totalorder %s27, 3
      %p212 = por %p210, %p211
      %p214 = scmp.ne.s32.totalorder %s197, %s213
      %p215 = scmp.eq.s32.totalorder %s27, 0
      %p216 = por %p214, %p215
      %p217 = scmp.le.s32.totalorder 1, %s21
      %p218 = scmp.lt.s32.totalorder %s21, 5
      %p219 = pnand %p217, %p218
      %p220 = pneg %p219
      // Predicated region
      $region9: #{tpu_custom_call.1} parent=5 // pred_check
        _
      $region10: #{tpu_custom_call.1} parent=5 // pred_check_branch
        %222 = sbr.rel (%p219) target = $region12
      $region11: #{tpu_custom_call.1} parent=5 // pred_region
        %s223 = ssub.s32 %s21, 1
        // Predicated region
        $region13: #{tpu_custom_call.1} parent=11 // pred_check
          %p224 = pneg %p94
        $region14: #{tpu_custom_call.1} parent=11 // pred_check_branch
          %226 = sbr.rel (%p224) target = $region16
        $region15: #{tpu_custom_call.1} parent=11 // pred_region
          _
        $region16: #{tpu_custom_call.1} parent=11 // pred_fallthru
          _
        // Predicated region
        $region17: #{tpu_custom_call.1} parent=11 // pred_check
          %p227 = pneg %p115
        $region18: #{tpu_custom_call.1} parent=11 // pred_check_branch
          %229 = sbr.rel (%p227) target = $region20
        $region19: #{tpu_custom_call.1} parent=11 // pred_region
          _
        $region20: #{tpu_custom_call.1} parent=11 // pred_fallthru
          _
        // Predicated region
        $region21: #{tpu_custom_call.1} parent=11 // pred_check
          %p230 = pneg %p136
        $region22: #{tpu_custom_call.1} parent=11 // pred_check_branch
          %232 = sbr.rel (%p230) target = $region24
        $region23: #{tpu_custom_call.1} parent=11 // pred_region
          _
        $region24: #{tpu_custom_call.1} parent=11 // pred_fallthru
          _
        // Predicated region
        $region25: #{tpu_custom_call.1} parent=11 // pred_check
          %p233 = pneg %p157
        $region26: #{tpu_custom_call.1} parent=11 // pred_check_branch
          %235 = sbr.rel (%p233) target = $region28
        $region27: #{tpu_custom_call.1} parent=11 // pred_region
          %s237 = ssub.s32 16, 16
          %238 = vsyncadd [#allocation4], %s237
          %s240 = sshll.u32 %s5, 4
          %s241 = int_to_ptr.vmem [resolvable:$true] %s240
          %243 = dma.vmem_to_smem %s241, 16, [#allocation2], [#allocation4]
        $region28: #{tpu_custom_call.1} parent=11 // pred_fallthru
          _
      $region12: #{tpu_custom_call.1} parent=5 // pred_fallthru
        _
      %p244 = scmp.lt.s32.totalorder %s21, 4
      // Predicated region
      $region29: #{tpu_custom_call.1} parent=5 // pred_check
        %p245 = pneg %p244
      $region30: #{tpu_custom_call.1} parent=5 // pred_check_branch
        %247 = sbr.rel (%p245) target = $region32
      $region31: #{tpu_custom_call.1} parent=5 // pred_region
        // Predicated region
        $region33: #{tpu_custom_call.1} parent=31 // pred_check
          %p248 = pneg %p41
        $region34: #{tpu_custom_call.1} parent=31 // pred_check_branch
          %250 = sbr.rel (%p248) target = $region36
        $region35: #{tpu_custom_call.1} parent=31 // pred_region
          %p251 = scmp.lt.s32.totalorder %s21, 3
          %s252 = scalar_select %p251, %s21, 3
          %s253 = smul.addr %s252, 2
          %s254 = smul.addr %s253, 8
          %s255 = scalar_lea.vmem %s0, %s254
        $region36: #{tpu_custom_call.1} parent=31 // pred_fallthru
          _
        // Predicated region
        $region37: #{tpu_custom_call.1} parent=31 // pred_check
          %p256 = pneg %p67
        $region38: #{tpu_custom_call.1} parent=31 // pred_check_branch
          %258 = sbr.rel (%p256) target = $region40
        $region39: #{tpu_custom_call.1} parent=31 // pred_region
          %p259 = scmp.lt.s32.totalorder %s21, 3
          %s260 = scalar_select %p259, %s21, 3
          %s261 = smul.addr %s260, 2
          %s262 = smul.addr %s261, 8
          %s263 = scalar_lea.vmem %s1, %s262
        $region40: #{tpu_custom_call.1} parent=31 // pred_fallthru
          _
      $region32: #{tpu_custom_call.1} parent=5 // pred_fallthru
        _
      %p264 = scmp.le.s32.totalorder 1, %s21
      %p265 = scmp.lt.s32.totalorder %s21, 5
      %p266 = pnand %p264, %p265
      %p267 = pneg %p266
      // Predicated region
      $region41: #{tpu_custom_call.1} parent=5 // pred_check
        _
      $region42: #{tpu_custom_call.1} parent=5 // pred_check_branch
        %269 = sbr.rel (%p266) target = $region44
      $region43: #{tpu_custom_call.1} parent=5 // pred_region
        %s270 = ssub.s32 %s21, 1
        // Predicated region
        $region45: #{tpu_custom_call.1} parent=43 // pred_check
          %p271 = pneg %p157
        $region46: #{tpu_custom_call.1} parent=43 // pred_check_branch
          %273 = sbr.rel (%p271) target = $region48
        $region47: #{tpu_custom_call.1} parent=43 // pred_region
          %274 = dma.done [#allocation4], 16
        $region48: #{tpu_custom_call.1} parent=43 // pred_fallthru
          _
        %275 = sfence
        %p276 = scmp.lt.s32.totalorder %s26, 3
        %s277 = scalar_select %p276, %s26, 3
        %s278 = smul.addr %s277, 2
        %s279 = smul.addr %s278, 8
        %s280 = scalar_lea.vmem %s0, %s279
        %p281 = pneg %p47
        %p282 = pneg %p44
        %p283 = scmp.lt.s32.totalorder %s26, 3
        %s284 = scalar_select %p283, %s26, 3
        %s285 = smul.addr %s284, 2
        %s286 = smul.addr %s285, 8
        %s287 = scalar_lea.vmem %s1, %s286
        %p288 = pneg %p73
        %p289 = pneg %p70
        %p290 = pneg %p94
        %p291 = pneg %p91
        %p292 = pneg %p115
        %p293 = pneg %p112
        %p294 = pneg %p136
        %p295 = pneg %p133
        %p296 = pneg %p157
        %p297 = pneg %p154
        %p298 = pneg %p183
        %p299 = pneg %p180
        %s300 = sand.u32 %s170, 1
        %s301 = scalar_lea.sflag [#allocation3], %s300
        %s302 = sand.u32 %s170, 1
        %s303 = smul.addr %s302, 16
        %s304 = scalar_lea.vmem [#allocation5], %s303
        %p305 = pneg %p209
        %p306 = pneg %p206
        %s307 = sand.u32 %s196, 1
        %s308 = scalar_lea.sflag [#allocation7], %s307
        %s309 = sand.u32 %s196, 1
        %s310 = smul.addr %s309, 16
        %s311 = scalar_lea.vmem [#allocation6], %s310
        %p312 = scmp.lt.s32.totalorder %s26, 3
        %s313 = scalar_select %p312, %s26, 3
        %s314 = smul.addr %s313, 2
        %s315 = smul.addr %s314, 8
        %s316 = scalar_lea.vmem %s0, %s315
        %p317 = scmp.lt.s32.totalorder %s26, 3
        %s318 = scalar_select %p317, %s26, 3
        %s319 = smul.addr %s318, 2
        %s320 = smul.addr %s319, 8
        %s321 = scalar_lea.vmem %s1, %s320
        %v322 = vld [vmem:[%s316] sm:$0xff]
        %v323 = vld [vmem:[%s316 + $0x8] sm:$0xff]
        %v324 = vld [vmem:[%s321] sm:$0xff]
        %v325 = vld [vmem:[%s321 + $0x8] sm:$0xff]
        %v326 = vld [vmem:[%s4] sm:$0xff]
        %v327 = vld [vmem:[%s2] sm:$0xff]
        %v328 = vld [vmem:[%s2 + $0x8] sm:$0x1]
        %s329 = scalar_lea.vmem %s2, 16
        %v330 = vld [vmem:[%s329] sm:$0xff]
        %v331 = vld [vmem:[%s329 + $0x8] sm:$0x1]
        %vm332 = vcmask 72704
        %v334 = vsel %vm332, %v322, 0
        %v337 = vsel %vm332, %v323, 0
        %vm339 = vcmask 1040384
        %v341 = vsel %vm339, %v328, 0
        %343 = vmatprep.subr.mxu0 0.0
        %344 = vmatpush1.msra.mxu0 %v327
        %345 = vmatprep.subr.mxu0 0.0
        %346 = vmatpush1.msra.mxu0 %v341
        %347 = vmatprep.subr.mxu0 0.0
        %348 = vmatpush1.msra.mxu0 0.0
        %349 = vmatprep.subr.mxu0 0.0
        %350 = vmatpush1.msra.mxu0 0.0
        %351 = vmatprep.subr.mxu0 0.0
        %352 = vmatpush1.msra.mxu0 0.0
        %353 = vmatprep.subr.mxu0 0.0
        %354 = vmatpush1.msra.mxu0 0.0
        %355 = vmatprep.subr.mxu0 0.0
        %356 = vmatpush1.msra.mxu0 0.0
        %357 = vmatprep.subr.mxu0 0.0
        %358 = vmatpush1.msra.mxu0 0.0
        %359 = vmatprep.subr.mxu0 0.0
        %360 = vmatpush1.msra.mxu0 0.0
        %361 = vmatprep.subr.mxu0 0.0
        %362 = vmatpush1.msra.mxu0 0.0
        %363 = vmatprep.subr.mxu0 0.0
        %364 = vmatpush1.msra.mxu0 0.0
        %365 = vmatprep.subr.mxu0 0.0
        %366 = vmatpush1.msra.mxu0 0.0
        %367 = vmatprep.subr.mxu0 0.0
        %368 = vmatpush1.msra.mxu0 0.0
        %369 = vmatprep.subr.mxu0 0.0
        %370 = vmatpush1.msra.mxu0 0.0
        %371 = vmatprep.subr.mxu0 0.0
        %372 = vmatpush1.msra.mxu0 0.0
        %373 = vmatprep.subr.mxu0 0.0
        %374 = vmatpush1.msra.mxu0 0.0
        %375 = vmatprep.subr.mxu0 0.0
        %376 = vmatpush1.msra.mxu0 0.0
        %377 = vmatprep.subr.mxu0 0.0
        %378 = vmatpush1.msra.mxu0 0.0
        %379 = vmatprep.subr.mxu0 0.0
        %380 = vmatpush1.msra.mxu0 0.0
        %381 = vmatprep.subr.mxu0 0.0
        %382 = vmatpush1.msra.mxu0 0.0
        %383 = vmatprep.subr.mxu0 0.0
        %384 = vmatpush1.msra.mxu0 0.0
        %385 = vmatprep.subr.mxu0 0.0
        %386 = vmatpush1.msra.mxu0 0.0
        %387 = vmatprep.subr.mxu0 0.0
        %388 = vmatpush1.msra.mxu0 0.0
        %389 = vmatprep.subr.mxu0 0.0
        %390 = vmatpush1.msra.mxu0 0.0
        %391 = vmatprep.subr.mxu0 0.0
        %392 = vmatpush1.msra.mxu0 0.0
        %393 = vmatprep.subr.mxu0 0.0
        %394 = vmatpush1.msra.mxu0 0.0
        %395 = vmatprep.subr.mxu0 0.0
        %396 = vmatpush1.msra.mxu0 0.0
        %397 = vmatprep.subr.mxu0 0.0
        %398 = vmatpush1.msra.mxu0 0.0
        %399 = vmatprep.subr.mxu0 0.0
        %400 = vmatpush1.msra.mxu0 0.0
        %401 = vmatprep.subr.mxu0 0.0
        %402 = vmatpush1.msra.mxu0 0.0
        %403 = vmatprep.subr.mxu0 0.0
        %404 = vmatpush1.msra.mxu0 0.0
        %405 = vmatprep.subr.mxu0 0.0
        %406 = vmatpush1.msra.mxu0 0.0
        %407 = vmatprep.mubr.f32.mxu0 0.0
        %408 = vmatmul.mubr.f32.gmra.mrb[0].mxu0 %v334
        %v409 = vpop.f32.mrb[0].mxu0
        %v410 = vadd.f32 0.0, %v409
        %v411 = vpop.f32.mrb[0].mxu0
        %412 = vmatprep.mubr.f32.mxu0 0.0
        %413 = vmatmul.mubr.f32.gmra.mrb[0].mxu0 %v337
        %v414 = vpop.f32.mrb[0].mxu0
        %v415 = vadd.f32 0.0, %v414
        %v416 = vpop.f32.mrb[0].mxu0
        %417 = vdwg.mxu0
        %v419 = vsel %vm339, %v331, 0
        %421 = vmatprep.subr.mxu0 0.0
        %422 = vmatpush1.msra.mxu0 %v330
        %423 = vmatprep.subr.mxu0 0.0
        %424 = vmatpush1.msra.mxu0 %v419
        %425 = vmatprep.subr.mxu0 0.0
        %426 = vmatpush1.msra.mxu0 0.0
        %427 = vmatprep.subr.mxu0 0.0
        %428 = vmatpush1.msra.mxu0 0.0
        %429 = vmatprep.subr.mxu0 0.0
        %430 = vmatpush1.msra.mxu0 0.0
        %431 = vmatprep.subr.mxu0 0.0
        %432 = vmatpush1.msra.mxu0 0.0
        %433 = vmatprep.subr.mxu0 0.0
        %434 = vmatpush1.msra.mxu0 0.0
        %435 = vmatprep.subr.mxu0 0.0
        %436 = vmatpush1.msra.mxu0 0.0
        %437 = vmatprep.subr.mxu0 0.0
        %438 = vmatpush1.msra.mxu0 0.0
        %439 = vmatprep.subr.mxu0 0.0
        %440 = vmatpush1.msra.mxu0 0.0
        %441 = vmatprep.subr.mxu0 0.0
        %442 = vmatpush1.msra.mxu0 0.0
        %443 = vmatprep.subr.mxu0 0.0
        %444 = vmatpush1.msra.mxu0 0.0
        %445 = vmatprep.subr.mxu0 0.0
        %446 = vmatpush1.msra.mxu0 0.0
        %447 = vmatprep.subr.mxu0 0.0
        %448 = vmatpush1.msra.mxu0 0.0
        %449 = vmatprep.subr.mxu0 0.0
        %450 = vmatpush1.msra.mxu0 0.0
        %451 = vmatprep.subr.mxu0 0.0
        %452 = vmatpush1.msra.mxu0 0.0
        %453 = vmatprep.subr.mxu0 0.0
        %454 = vmatpush1.msra.mxu0 0.0
        %455 = vmatprep.subr.mxu0 0.0
        %456 = vmatpush1.msra.mxu0 0.0
        %457 = vmatprep.subr.mxu0 0.0
        %458 = vmatpush1.msra.mxu0 0.0
        %459 = vmatprep.subr.mxu0 0.0
        %460 = vmatpush1.msra.mxu0 0.0
        %461 = vmatprep.subr.mxu0 0.0
        %462 = vmatpush1.msra.mxu0 0.0
        %463 = vmatprep.subr.mxu0 0.0
        %464 = vmatpush1.msra.mxu0 0.0
        %465 = vmatprep.subr.mxu0 0.0
        %466 = vmatpush1.msra.mxu0 0.0
        %467 = vmatprep.subr.mxu0 0.0
        %468 = vmatpush1.msra.mxu0 0.0
        %469 = vmatprep.subr.mxu0 0.0
        %470 = vmatpush1.msra.mxu0 0.0
        %471 = vmatprep.subr.mxu0 0.0
        %472 = vmatpush1.msra.mxu0 0.0
        %473 = vmatprep.subr.mxu0 0.0
        %474 = vmatpush1.msra.mxu0 0.0
        %475 = vmatprep.subr.mxu0 0.0
        %476 = vmatpush1.msra.mxu0 0.0
        %477 = vmatprep.subr.mxu0 0.0
        %478 = vmatpush1.msra.mxu0 0.0
        %479 = vmatprep.subr.mxu0 0.0
        %480 = vmatpush1.msra.mxu0 0.0
        %481 = vmatprep.subr.mxu0 0.0
        %482 = vmatpush1.msra.mxu0 0.0
        %483 = vmatprep.subr.mxu0 0.0
        %484 = vmatpush1.msra.mxu0 0.0
        %485 = vmatprep.mubr.f32.mxu0 0.0
        %486 = vmatmul.mubr.f32.gmra.mrb[0].mxu0 %v334
        %v487 = vpop.f32.mrb[0].mxu0
        %v488 = vadd.f32 0.0, %v487
        %v489 = vpop.f32.mrb[0].mxu0
        %490 = vmatprep.mubr.f32.mxu0 0.0
        %491 = vmatmul.mubr.f32.gmra.mrb[0].mxu0 %v337
        %v492 = vpop.f32.mrb[0].mxu0
        %v493 = vadd.f32 0.0, %v492
        %v494 = vpop.f32.mrb[0].mxu0
        %495 = vdwg.mxu0
        %v497 = vcombine.high %v488, %v488
        %v499 = vunpack.c.l.s4 1966171168
        %v500 = vunpack.c.0.s8 %v499
        %v501 = vlaneseq
        %v502 = vshrl.u32 %v501, 7
        %v503 = vsub.s32 %v500, %v502
        %v504 = vrot.slane %v488, %v503
        %v506 = vunpack.c.l.s4 1966171168
        %v507 = vunpack.c.0.s8 %v506
        %v508 = vlaneseq
        %v509 = vshrl.u32 %v508, 7
        %v510 = vsub.s32 %v507, %v509
        %v511 = vrot.slane %v497, %v510
        %v512 = vcombine.high %v504, %v504
        %v513 = vcombine.high %v511, %v511
        %v515 = vunpack.c.l.s4 1966171168
        %v516 = vunpack.c.0.s8 %v515
        %v517 = vlaneseq
        %v518 = vshrl.u32 %v517, 7
        %v519 = vsub.s32 %v516, %v518
        %v520 = vrot.slane %v504, %v519
        %v522 = vunpack.c.l.s4 1966171168
        %v523 = vunpack.c.0.s8 %v522
        %v524 = vlaneseq
        %v525 = vshrl.u32 %v524, 7
        %v526 = vsub.s32 %v523, %v525
        %v527 = vrot.slane %v511, %v526
        %v529 = vunpack.c.l.s4 1966171168
        %v530 = vunpack.c.0.s8 %v529
        %v531 = vlaneseq
        %v532 = vshrl.u32 %v531, 7
        %v533 = vsub.s32 %v530, %v532
        %v534 = vrot.slane %v512, %v533
        %v536 = vunpack.c.l.s4 1966171168
        %v537 = vunpack.c.0.s8 %v536
        %v538 = vlaneseq
        %v539 = vshrl.u32 %v538, 7
        %v540 = vsub.s32 %v537, %v539
        %v541 = vrot.slane %v513, %v540
        %v542 = vcombine.high %v520, %v520
        %v543 = vcombine.high %v527, %v527
        %v544 = vcombine.high %v534, %v534
        %v545 = vcombine.high %v541, %v541
        %v546 = vlaneseq
        %v547 = vshrl.u32 %v546, 7
        %v548 = vsub.s32 0, %v547
        %v549 = vrot.slane %v520, %v548
        %v550 = vlaneseq
        %v551 = vshrl.u32 %v550, 7
        %v552 = vsub.s32 0, %v551
        %v553 = vrot.slane %v534, %v552
        %v554 = vlaneseq
        %v555 = vshrl.u32 %v554, 7
        %v556 = vsub.s32 0, %v555
        %v557 = vrot.slane %v542, %v556
        %v558 = vlaneseq
        %v559 = vshrl.u32 %v558, 7
        %v560 = vsub.s32 0, %v559
        %v561 = vrot.slane %v544, %v560
        %v562 = vlaneseq
        %v563 = vshrl.u32 %v562, 7
        %v564 = vsub.s32 0, %v563
        %v565 = vrot.slane %v527, %v564
        %v566 = vlaneseq
        %v567 = vshrl.u32 %v566, 7
        %v568 = vsub.s32 0, %v567
        %v569 = vrot.slane %v541, %v568
        %v570 = vlaneseq
        %v571 = vshrl.u32 %v570, 7
        %v572 = vsub.s32 0, %v571
        %v573 = vrot.slane %v543, %v572
        %v574 = vlaneseq
        %v575 = vshrl.u32 %v574, 7
        %v576 = vsub.s32 0, %v575
        %v577 = vrot.slane %v545, %v576
        %v586 = vadd.f32 %v549, %v410
        %v587 = vadd.f32 %v549, %v415
        %v588 = vadd.f32 %v553, %v410
        %v589 = vadd.f32 %v553, %v415
        %v590 = vadd.f32 %v557, %v410
        %v591 = vadd.f32 %v557, %v415
        %v592 = vadd.f32 %v561, %v410
        %v593 = vadd.f32 %v561, %v415
        %v594 = vadd.f32 %v565, %v410
        %v595 = vadd.f32 %v565, %v415
        %v596 = vadd.f32 %v569, %v410
        %v597 = vadd.f32 %v569, %v415
        %v598 = vadd.f32 %v573, %v410
        %v599 = vadd.f32 %v573, %v415
        %v600 = vadd.f32 %v577, %v410
        %v601 = vadd.f32 %v577, %v415
        %vm602 = vcmp.gt.f32.partialorder %v586, 0.0
        %vm603 = vcmp.gt.f32.partialorder %v587, 0.0
        %vm604 = vcmp.gt.f32.partialorder %v588, 0.0
        %vm605 = vcmp.gt.f32.partialorder %v589, 0.0
        %vm606 = vcmp.gt.f32.partialorder %v590, 0.0
        %vm607 = vcmp.gt.f32.partialorder %v591, 0.0
        %vm608 = vcmp.gt.f32.partialorder %v592, 0.0
        %vm609 = vcmp.gt.f32.partialorder %v593, 0.0
        %vm610 = vcmp.gt.f32.partialorder %v594, 0.0
        %vm611 = vcmp.gt.f32.partialorder %v595, 0.0
        %vm612 = vcmp.gt.f32.partialorder %v596, 0.0
        %vm613 = vcmp.gt.f32.partialorder %v597, 0.0
        %vm614 = vcmp.gt.f32.partialorder %v598, 0.0
        %vm615 = vcmp.gt.f32.partialorder %v599, 0.0
        %vm616 = vcmp.gt.f32.partialorder %v600, 0.0
        %vm617 = vcmp.gt.f32.partialorder %v601, 0.0
        %v618 = vmul.f32 %v586, 0.2
        %v619 = vmul.f32 %v587, 0.2
        %v620 = vmul.f32 %v588, 0.2
        %v621 = vmul.f32 %v589, 0.2
        %v622 = vmul.f32 %v590, 0.2
        %v623 = vmul.f32 %v591, 0.2
        %v624 = vmul.f32 %v592, 0.2
        %v625 = vmul.f32 %v593, 0.2
        %v626 = vmul.f32 %v594, 0.2
        %v627 = vmul.f32 %v595, 0.2
        %v628 = vmul.f32 %v596, 0.2
        %v629 = vmul.f32 %v597, 0.2
        %v630 = vmul.f32 %v598, 0.2
        %v631 = vmul.f32 %v599, 0.2
        %v632 = vmul.f32 %v600, 0.2
        %v633 = vmul.f32 %v601, 0.2
        %v634 = vsel %vm602, %v586, %v618
        %v635 = vsel %vm603, %v587, %v619
        %v636 = vsel %vm604, %v588, %v620
        %v637 = vsel %vm605, %v589, %v621
        %v638 = vsel %vm606, %v590, %v622
        %v639 = vsel %vm607, %v591, %v623
        %v640 = vsel %vm608, %v592, %v624
        %v641 = vsel %vm609, %v593, %v625
        %v642 = vsel %vm610, %v594, %v626
        %v643 = vsel %vm611, %v595, %v627
        %v644 = vsel %vm612, %v596, %v628
        %v645 = vsel %vm613, %v597, %v629
        %v646 = vsel %vm614, %v598, %v630
        %v647 = vsel %vm615, %v599, %v631
        %v648 = vsel %vm616, %v600, %v632
        %v649 = vsel %vm617, %v601, %v633
        %v650 = vlaneseq
        %v651 = vshrl.u32 %v650, 7
        %v652 = vsub.s32 0, %v651
        %v653 = vrot.slane %v326, %v652
        %v654 = vmul.f32 %v634, %v653
        %v655 = vmul.f32 %v635, %v653
        %v656 = vmul.f32 %v636, %v653
        %v657 = vmul.f32 %v637, %v653
        %v658 = vmul.f32 %v638, %v653
        %v659 = vmul.f32 %v639, %v653
        %v660 = vmul.f32 %v640, %v653
        %v661 = vmul.f32 %v641, %v653
        %v662 = vmul.f32 %v642, %v653
        %v663 = vmul.f32 %v643, %v653
        %v664 = vmul.f32 %v644, %v653
        %v665 = vmul.f32 %v645, %v653
        %v666 = vmul.f32 %v646, %v653
        %v667 = vmul.f32 %v647, %v653
        %v668 = vmul.f32 %v648, %v653
        %v669 = vmul.f32 %v649, %v653
        %vm670 = vcmask 261120
        %v671 = vsel %vm670, %v654, 0.0
        %672 = vadd.xlane.f32.xlu0 %v671
        %v673 = vpop.xlane.xlu0 %672
        %v674 = vsel %vm670, %v655, 0.0
        %675 = vadd.xlane.f32.xlu0 %v674
        %v676 = vpop.xlane.xlu0 %675
        %v677 = vsel %vm670, %v656, 0.0
        %678 = vadd.xlane.f32.xlu0 %v677
        %v679 = vpop.xlane.xlu0 %678
        %v680 = vsel %vm670, %v657, 0.0
        %681 = vadd.xlane.f32.xlu0 %v680
        %v682 = vpop.xlane.xlu0 %681
        %v683 = vsel %vm670, %v658, 0.0
        %684 = vadd.xlane.f32.xlu0 %v683
        %v685 = vpop.xlane.xlu0 %684
        %v686 = vsel %vm670, %v659, 0.0
        %687 = vadd.xlane.f32.xlu0 %v686
        %v688 = vpop.xlane.xlu0 %687
        %v689 = vsel %vm670, %v660, 0.0
        %690 = vadd.xlane.f32.xlu0 %v689
        %v691 = vpop.xlane.xlu0 %690
        %v692 = vsel %vm670, %v661, 0.0
        %693 = vadd.xlane.f32.xlu0 %v692
        %v694 = vpop.xlane.xlu0 %693
        %v695 = vsel %vm670, %v662, 0.0
        %696 = vadd.xlane.f32.xlu0 %v695
        %v697 = vpop.xlane.xlu0 %696
        %v698 = vsel %vm670, %v663, 0.0
        %699 = vadd.xlane.f32.xlu0 %v698
        %v700 = vpop.xlane.xlu0 %699
        %v701 = vsel %vm670, %v664, 0.0
        %702 = vadd.xlane.f32.xlu0 %v701
        %v703 = vpop.xlane.xlu0 %702
        %v704 = vsel %vm670, %v665, 0.0
        %705 = vadd.xlane.f32.xlu0 %v704
        %v706 = vpop.xlane.xlu0 %705
        %v707 = vsel %vm670, %v666, 0.0
        %708 = vadd.xlane.f32.xlu0 %v707
        %v709 = vpop.xlane.xlu0 %708
        %v710 = vsel %vm670, %v667, 0.0
        %711 = vadd.xlane.f32.xlu0 %v710
        %v712 = vpop.xlane.xlu0 %711
        %v713 = vsel %vm670, %v668, 0.0
        %714 = vadd.xlane.f32.xlu0 %v713
        %v715 = vpop.xlane.xlu0 %714
        %v716 = vsel %vm670, %v669, 0.0
        %717 = vadd.xlane.f32.xlu0 %v716
        %v718 = vpop.xlane.xlu0 %717
        %vm719 = vcmp.gt.f32.partialorder %v324, 0.0
        %v736 = vlaneseq
        %v737 = vand.u32 %v736, 127
        %v738 = vlaneseq
        %v739 = vshrl.u32 %v738, 7
        %v740 = vsub.s32 %v737, %v739
        %v741 = vrot.slane %v673, %v740
        %v742 = vadd.s32 %v737, 4294967288
        %v743 = vlaneseq
        %v744 = vshrl.u32 %v743, 7
        %v745 = vsub.s32 %v742, %v744
        %v746 = vrot.slane %v676, %v745
        %vm747 = vcmask 130112
        %v748 = vsel %vm747, %v746, %v741
        %v749 = vlaneseq
        %v750 = vshrl.u32 %v749, 7
        %v751 = vsub.s32 %v737, %v750
        %v752 = vrot.slane %v679, %v751
        %v753 = vlaneseq
        %v754 = vshrl.u32 %v753, 7
        %v755 = vsub.s32 %v742, %v754
        %v756 = vrot.slane %v682, %v755
        %v757 = vsel %vm747, %v756, %v752
        %v758 = vlaneseq
        %v759 = vshrl.u32 %v758, 7
        %v760 = vsub.s32 %v737, %v759
        %v761 = vrot.slane %v685, %v760
        %v762 = vlaneseq
        %v763 = vshrl.u32 %v762, 7
        %v764 = vsub.s32 %v742, %v763
        %v765 = vrot.slane %v688, %v764
        %v766 = vsel %vm747, %v765, %v761
        %v767 = vlaneseq
        %v768 = vshrl.u32 %v767, 7
        %v769 = vsub.s32 %v737, %v768
        %v770 = vrot.slane %v691, %v769
        %v771 = vlaneseq
        %v772 = vshrl.u32 %v771, 7
        %v773 = vsub.s32 %v742, %v772
        %v774 = vrot.slane %v694, %v773
        %v775 = vsel %vm747, %v774, %v770
        %v776 = vlaneseq
        %v777 = vshrl.u32 %v776, 7
        %v778 = vsub.s32 %v737, %v777
        %v779 = vrot.slane %v697, %v778
        %v780 = vlaneseq
        %v781 = vshrl.u32 %v780, 7
        %v782 = vsub.s32 %v742, %v781
        %v783 = vrot.slane %v700, %v782
        %v784 = vsel %vm747, %v783, %v779
        %v785 = vlaneseq
        %v786 = vshrl.u32 %v785, 7
        %v787 = vsub.s32 %v737, %v786
        %v788 = vrot.slane %v703, %v787
        %v789 = vlaneseq
        %v790 = vshrl.u32 %v789, 7
        %v791 = vsub.s32 %v742, %v790
        %v792 = vrot.slane %v706, %v791
        %v793 = vsel %vm747, %v792, %v788
        %v794 = vlaneseq
        %v795 = vshrl.u32 %v794, 7
        %v796 = vsub.s32 %v737, %v795
        %v797 = vrot.slane %v709, %v796
        %v798 = vlaneseq
        %v799 = vshrl.u32 %v798, 7
        %v800 = vsub.s32 %v742, %v799
        %v801 = vrot.slane %v712, %v800
        %v802 = vsel %vm747, %v801, %v797
        %v803 = vlaneseq
        %v804 = vshrl.u32 %v803, 7
        %v805 = vsub.s32 %v737, %v804
        %v806 = vrot.slane %v715, %v805
        %v807 = vlaneseq
        %v808 = vshrl.u32 %v807, 7
        %v809 = vsub.s32 %v742, %v808
        %v810 = vrot.slane %v718, %v809
        %v811 = vsel %vm747, %v810, %v806
        %vm812 = vcmask 1041409
        %v813 = vsel %vm812, %v757, %v748
        %vm814 = vcmask 1042434
        %v815 = vsel %vm814, %v766, %v813
        %vm816 = vcmask 1043459
        %v817 = vsel %vm816, %v775, %v815
        %vm818 = vcmask 1044484
        %v819 = vsel %vm818, %v784, %v817
        %vm820 = vcmask 1045509
        %v821 = vsel %vm820, %v793, %v819
        %vm822 = vcmask 1046534
        %v823 = vsel %vm822, %v802, %v821
        %vm824 = vcmask 1047559
        %v825 = vsel %vm824, %v811, %v823
        %v827 = vsel %vm719, %v825, -1e+30
        %vm828 = vcmask 130048
        %v829 = vsel %vm828, %v827, -inf
        %830 = vmax.xlane.f32.xlu0 %v829
        %v831 = vpop.xlane.xlu0 %830
        %v832 = vsub.f32 %v827, %v831
        %v833 = vmul.f32 %v832, 1.442695
        %v834 = vpow.pop %v833
        %v835 = vmul.f32 %v834, %v324
        %v836 = vsel %vm828, %v835, 0.0
        %837 = vadd.xlane.f32.xlu0 %v836
        %v838 = vpop.xlane.xlu0 %837
        %v839 = vrcp.pop %v838
        %v840 = vmul.f32 %v835, %v839
        %v842 = vsel %vm828, %v840, 0
        %844 = vmatprep.subr.mxu0 0.0
        %845 = vmatpush1.msra.mxu0 %v410
        %846 = vmatprep.subr.mxu0 0.0
        %847 = vmatpush1.msra.mxu0 %v415
        %848 = vmatprep.subr.mxu0 0.0
        %849 = vmatpush1.msra.mxu0 0.0
        %850 = vmatprep.subr.mxu0 0.0
        %851 = vmatpush1.msra.mxu0 0.0
        %852 = vmatprep.subr.mxu0 0.0
        %853 = vmatpush1.msra.mxu0 0.0
        %854 = vmatprep.subr.mxu0 0.0
        %855 = vmatpush1.msra.mxu0 0.0
        %856 = vmatprep.subr.mxu0 0.0
        %857 = vmatpush1.msra.mxu0 0.0
        %858 = vmatprep.subr.mxu0 0.0
        %859 = vmatpush1.msra.mxu0 0.0
        %860 = vmatprep.subr.mxu0 0.0
        %861 = vmatpush1.msra.mxu0 0.0
        %862 = vmatprep.subr.mxu0 0.0
        %863 = vmatpush1.msra.mxu0 0.0
        %864 = vmatprep.subr.mxu0 0.0
        %865 = vmatpush1.msra.mxu0 0.0
        %866 = vmatprep.subr.mxu0 0.0
        %867 = vmatpush1.msra.mxu0 0.0
        %868 = vmatprep.subr.mxu0 0.0
        %869 = vmatpush1.msra.mxu0 0.0
        %870 = vmatprep.subr.mxu0 0.0
        %871 = vmatpush1.msra.mxu0 0.0
        %872 = vmatprep.subr.mxu0 0.0
        %873 = vmatpush1.msra.mxu0 0.0
        %874 = vmatprep.subr.mxu0 0.0
        %875 = vmatpush1.msra.mxu0 0.0
        %876 = vmatprep.subr.mxu0 0.0
        %877 = vmatpush1.msra.mxu0 0.0
        %878 = vmatprep.subr.mxu0 0.0
        %879 = vmatpush1.msra.mxu0 0.0
        %880 = vmatprep.subr.mxu0 0.0
        %881 = vmatpush1.msra.mxu0 0.0
        %882 = vmatprep.subr.mxu0 0.0
        %883 = vmatpush1.msra.mxu0 0.0
        %884 = vmatprep.subr.mxu0 0.0
        %885 = vmatpush1.msra.mxu0 0.0
        %886 = vmatprep.subr.mxu0 0.0
        %887 = vmatpush1.msra.mxu0 0.0
        %888 = vmatprep.subr.mxu0 0.0
        %889 = vmatpush1.msra.mxu0 0.0
        %890 = vmatprep.subr.mxu0 0.0
        %891 = vmatpush1.msra.mxu0 0.0
        %892 = vmatprep.subr.mxu0 0.0
        %893 = vmatpush1.msra.mxu0 0.0
        %894 = vmatprep.subr.mxu0 0.0
        %895 = vmatpush1.msra.mxu0 0.0
        %896 = vmatprep.subr.mxu0 0.0
        %897 = vmatpush1.msra.mxu0 0.0
        %898 = vmatprep.subr.mxu0 0.0
        %899 = vmatpush1.msra.mxu0 0.0
        %900 = vmatprep.subr.mxu0 0.0
        %901 = vmatpush1.msra.mxu0 0.0
        %902 = vmatprep.subr.mxu0 0.0
        %903 = vmatpush1.msra.mxu0 0.0
        %904 = vmatprep.subr.mxu0 0.0
        %905 = vmatpush1.msra.mxu0 0.0
        %906 = vmatprep.subr.mxu0 0.0
        %907 = vmatpush1.msra.mxu0 0.0
        %908 = vmatprep.mubr.f32.mxu0 0.0
        %909 = vmatmul.mubr.f32.gmra.mrb[0].mxu0 %v842
        %v910 = vpop.f32.mrb[0].mxu0
        %v911 = vadd.f32 0.0, %v910
        %v912 = vpop.f32.mrb[0].mxu0
        %913 = vdwg.mxu0
        %v915 = vcombine.high %v493, %v493
        %v917 = vunpack.c.l.s4 1966171168
        %v918 = vunpack.c.0.s8 %v917
        %v919 = vlaneseq
        %v920 = vshrl.u32 %v919, 7
        %v921 = vsub.s32 %v918, %v920
        %v922 = vrot.slane %v493, %v921
        %v924 = vunpack.c.l.s4 1966171168
        %v925 = vunpack.c.0.s8 %v924
        %v926 = vlaneseq
        %v927 = vshrl.u32 %v926, 7
        %v928 = vsub.s32 %v925, %v927
        %v929 = vrot.slane %v915, %v928
        %v930 = vcombine.high %v922, %v922
        %v931 = vcombine.high %v929, %v929
        %v933 = vunpack.c.l.s4 1966171168
        %v934 = vunpack.c.0.s8 %v933
        %v935 = vlaneseq
        %v936 = vshrl.u32 %v935, 7
        %v937 = vsub.s32 %v934, %v936
        %v938 = vrot.slane %v922, %v937
        %v940 = vunpack.c.l.s4 1966171168
        %v941 = vunpack.c.0.s8 %v940
        %v942 = vlaneseq
        %v943 = vshrl.u32 %v942, 7
        %v944 = vsub.s32 %v941, %v943
        %v945 = vrot.slane %v929, %v944
        %v947 = vunpack.c.l.s4 1966171168
        %v948 = vunpack.c.0.s8 %v947
        %v949 = vlaneseq
        %v950 = vshrl.u32 %v949, 7
        %v951 = vsub.s32 %v948, %v950
        %v952 = vrot.slane %v930, %v951
        %v954 = vunpack.c.l.s4 1966171168
        %v955 = vunpack.c.0.s8 %v954
        %v956 = vlaneseq
        %v957 = vshrl.u32 %v956, 7
        %v958 = vsub.s32 %v955, %v957
        %v959 = vrot.slane %v931, %v958
        %v960 = vcombine.high %v938, %v938
        %v961 = vcombine.high %v945, %v945
        %v962 = vcombine.high %v952, %v952
        %v963 = vcombine.high %v959, %v959
        %v964 = vlaneseq
        %v965 = vshrl.u32 %v964, 7
        %v966 = vsub.s32 0, %v965
        %v967 = vrot.slane %v938, %v966
        %v968 = vlaneseq
        %v969 = vshrl.u32 %v968, 7
        %v970 = vsub.s32 0, %v969
        %v971 = vrot.slane %v952, %v970
        %v972 = vlaneseq
        %v973 = vshrl.u32 %v972, 7
        %v974 = vsub.s32 0, %v973
        %v975 = vrot.slane %v960, %v974
        %v976 = vlaneseq
        %v977 = vshrl.u32 %v976, 7
        %v978 = vsub.s32 0, %v977
        %v979 = vrot.slane %v962, %v978
        %v980 = vlaneseq
        %v981 = vshrl.u32 %v980, 7
        %v982 = vsub.s32 0, %v981
        %v983 = vrot.slane %v945, %v982
        %v984 = vlaneseq
        %v985 = vshrl.u32 %v984, 7
        %v986 = vsub.s32 0, %v985
        %v987 = vrot.slane %v959, %v986
        %v988 = vlaneseq
        %v989 = vshrl.u32 %v988, 7
        %v990 = vsub.s32 0, %v989
        %v991 = vrot.slane %v961, %v990
        %v992 = vlaneseq
        %v993 = vshrl.u32 %v992, 7
        %v994 = vsub.s32 0, %v993
        %v995 = vrot.slane %v963, %v994
        %v1004 = vadd.f32 %v967, %v410
        %v1005 = vadd.f32 %v967, %v415
        %v1006 = vadd.f32 %v971, %v410
        %v1007 = vadd.f32 %v971, %v415
        %v1008 = vadd.f32 %v975, %v410
        %v1009 = vadd.f32 %v975, %v415
        %v1010 = vadd.f32 %v979, %v410
        %v1011 = vadd.f32 %v979, %v415
        %v1012 = vadd.f32 %v983, %v410
        %v1013 = vadd.f32 %v983, %v415
        %v1014 = vadd.f32 %v987, %v410
        %v1015 = vadd.f32 %v987, %v415
        %v1016 = vadd.f32 %v991, %v410
        %v1017 = vadd.f32 %v991, %v415
        %v1018 = vadd.f32 %v995, %v410
        %v1019 = vadd.f32 %v995, %v415
        %vm1020 = vcmp.gt.f32.partialorder %v1004, 0.0
        %vm1021 = vcmp.gt.f32.partialorder %v1005, 0.0
        %vm1022 = vcmp.gt.f32.partialorder %v1006, 0.0
        %vm1023 = vcmp.gt.f32.partialorder %v1007, 0.0
        %vm1024 = vcmp.gt.f32.partialorder %v1008, 0.0
        %vm1025 = vcmp.gt.f32.partialorder %v1009, 0.0
        %vm1026 = vcmp.gt.f32.partialorder %v1010, 0.0
        %vm1027 = vcmp.gt.f32.partialorder %v1011, 0.0
        %vm1028 = vcmp.gt.f32.partialorder %v1012, 0.0
        %vm1029 = vcmp.gt.f32.partialorder %v1013, 0.0
        %vm1030 = vcmp.gt.f32.partialorder %v1014, 0.0
        %vm1031 = vcmp.gt.f32.partialorder %v1015, 0.0
        %vm1032 = vcmp.gt.f32.partialorder %v1016, 0.0
        %vm1033 = vcmp.gt.f32.partialorder %v1017, 0.0
        %vm1034 = vcmp.gt.f32.partialorder %v1018, 0.0
        %vm1035 = vcmp.gt.f32.partialorder %v1019, 0.0
        %v1036 = vmul.f32 %v1004, 0.2
        %v1037 = vmul.f32 %v1005, 0.2
        %v1038 = vmul.f32 %v1006, 0.2
        %v1039 = vmul.f32 %v1007, 0.2
        %v1040 = vmul.f32 %v1008, 0.2
        %v1041 = vmul.f32 %v1009, 0.2
        %v1042 = vmul.f32 %v1010, 0.2
        %v1043 = vmul.f32 %v1011, 0.2
        %v1044 = vmul.f32 %v1012, 0.2
        %v1045 = vmul.f32 %v1013, 0.2
        %v1046 = vmul.f32 %v1014, 0.2
        %v1047 = vmul.f32 %v1015, 0.2
        %v1048 = vmul.f32 %v1016, 0.2
        %v1049 = vmul.f32 %v1017, 0.2
        %v1050 = vmul.f32 %v1018, 0.2
        %v1051 = vmul.f32 %v1019, 0.2
        %v1052 = vsel %vm1020, %v1004, %v1036
        %v1053 = vsel %vm1021, %v1005, %v1037
        %v1054 = vsel %vm1022, %v1006, %v1038
        %v1055 = vsel %vm1023, %v1007, %v1039
        %v1056 = vsel %vm1024, %v1008, %v1040
        %v1057 = vsel %vm1025, %v1009, %v1041
        %v1058 = vsel %vm1026, %v1010, %v1042
        %v1059 = vsel %vm1027, %v1011, %v1043
        %v1060 = vsel %vm1028, %v1012, %v1044
        %v1061 = vsel %vm1029, %v1013, %v1045
        %v1062 = vsel %vm1030, %v1014, %v1046
        %v1063 = vsel %vm1031, %v1015, %v1047
        %v1064 = vsel %vm1032, %v1016, %v1048
        %v1065 = vsel %vm1033, %v1017, %v1049
        %v1066 = vsel %vm1034, %v1018, %v1050
        %v1067 = vsel %vm1035, %v1019, %v1051
        %v1068 = vmul.f32 %v1052, %v653
        %v1069 = vmul.f32 %v1053, %v653
        %v1070 = vmul.f32 %v1054, %v653
        %v1071 = vmul.f32 %v1055, %v653
        %v1072 = vmul.f32 %v1056, %v653
        %v1073 = vmul.f32 %v1057, %v653
        %v1074 = vmul.f32 %v1058, %v653
        %v1075 = vmul.f32 %v1059, %v653
        %v1076 = vmul.f32 %v1060, %v653
        %v1077 = vmul.f32 %v1061, %v653
        %v1078 = vmul.f32 %v1062, %v653
        %v1079 = vmul.f32 %v1063, %v653
        %v1080 = vmul.f32 %v1064, %v653
        %v1081 = vmul.f32 %v1065, %v653
        %v1082 = vmul.f32 %v1066, %v653
        %v1083 = vmul.f32 %v1067, %v653
        %v1084 = vsel %vm670, %v1068, 0.0
        %1085 = vadd.xlane.f32.xlu0 %v1084
        %v1086 = vpop.xlane.xlu0 %1085
        %v1087 = vsel %vm670, %v1069, 0.0
        %1088 = vadd.xlane.f32.xlu0 %v1087
        %v1089 = vpop.xlane.xlu0 %1088
        %v1090 = vsel %vm670, %v1070, 0.0
        %1091 = vadd.xlane.f32.xlu0 %v1090
        %v1092 = vpop.xlane.xlu0 %1091
        %v1093 = vsel %vm670, %v1071, 0.0
        %1094 = vadd.xlane.f32.xlu0 %v1093
        %v1095 = vpop.xlane.xlu0 %1094
        %v1096 = vsel %vm670, %v1072, 0.0
        %1097 = vadd.xlane.f32.xlu0 %v1096
        %v1098 = vpop.xlane.xlu0 %1097
        %v1099 = vsel %vm670, %v1073, 0.0
        %1100 = vadd.xlane.f32.xlu0 %v1099
        %v1101 = vpop.xlane.xlu0 %1100
        %v1102 = vsel %vm670, %v1074, 0.0
        %1103 = vadd.xlane.f32.xlu0 %v1102
        %v1104 = vpop.xlane.xlu0 %1103
        %v1105 = vsel %vm670, %v1075, 0.0
        %1106 = vadd.xlane.f32.xlu0 %v1105
        %v1107 = vpop.xlane.xlu0 %1106
        %v1108 = vsel %vm670, %v1076, 0.0
        %1109 = vadd.xlane.f32.xlu0 %v1108
        %v1110 = vpop.xlane.xlu0 %1109
        %v1111 = vsel %vm670, %v1077, 0.0
        %1112 = vadd.xlane.f32.xlu0 %v1111
        %v1113 = vpop.xlane.xlu0 %1112
        %v1114 = vsel %vm670, %v1078, 0.0
        %1115 = vadd.xlane.f32.xlu0 %v1114
        %v1116 = vpop.xlane.xlu0 %1115
        %v1117 = vsel %vm670, %v1079, 0.0
        %1118 = vadd.xlane.f32.xlu0 %v1117
        %v1119 = vpop.xlane.xlu0 %1118
        %v1120 = vsel %vm670, %v1080, 0.0
        %1121 = vadd.xlane.f32.xlu0 %v1120
        %v1122 = vpop.xlane.xlu0 %1121
        %v1123 = vsel %vm670, %v1081, 0.0
        %1124 = vadd.xlane.f32.xlu0 %v1123
        %v1125 = vpop.xlane.xlu0 %1124
        %v1126 = vsel %vm670, %v1082, 0.0
        %1127 = vadd.xlane.f32.xlu0 %v1126
        %v1128 = vpop.xlane.xlu0 %1127
        %v1129 = vsel %vm670, %v1083, 0.0
        %1130 = vadd.xlane.f32.xlu0 %v1129
        %v1131 = vpop.xlane.xlu0 %1130
        %vm1132 = vcmp.gt.f32.partialorder %v325, 0.0
        %v1149 = vlaneseq
        %v1150 = vshrl.u32 %v1149, 7
        %v1151 = vsub.s32 %v737, %v1150
        %v1152 = vrot.slane %v1086, %v1151
        %v1153 = vlaneseq
        %v1154 = vshrl.u32 %v1153, 7
        %v1155 = vsub.s32 %v742, %v1154
        %v1156 = vrot.slane %v1089, %v1155
        %v1157 = vsel %vm747, %v1156, %v1152
        %v1158 = vlaneseq
        %v1159 = vshrl.u32 %v1158, 7
        %v1160 = vsub.s32 %v737, %v1159
        %v1161 = vrot.slane %v1092, %v1160
        %v1162 = vlaneseq
        %v1163 = vshrl.u32 %v1162, 7
        %v1164 = vsub.s32 %v742, %v1163
        %v1165 = vrot.slane %v1095, %v1164
        %v1166 = vsel %vm747, %v1165, %v1161
        %v1167 = vlaneseq
        %v1168 = vshrl.u32 %v1167, 7
        %v1169 = vsub.s32 %v737, %v1168
        %v1170 = vrot.slane %v1098, %v1169
        %v1171 = vlaneseq
        %v1172 = vshrl.u32 %v1171, 7
        %v1173 = vsub.s32 %v742, %v1172
        %v1174 = vrot.slane %v1101, %v1173
        %v1175 = vsel %vm747, %v1174, %v1170
        %v1176 = vlaneseq
        %v1177 = vshrl.u32 %v1176, 7
        %v1178 = vsub.s32 %v737, %v1177
        %v1179 = vrot.slane %v1104, %v1178
        %v1180 = vlaneseq
        %v1181 = vshrl.u32 %v1180, 7
        %v1182 = vsub.s32 %v742, %v1181
        %v1183 = vrot.slane %v1107, %v1182
        %v1184 = vsel %vm747, %v1183, %v1179
        %v1185 = vlaneseq
        %v1186 = vshrl.u32 %v1185, 7
        %v1187 = vsub.s32 %v737, %v1186
        %v1188 = vrot.slane %v1110, %v1187
        %v1189 = vlaneseq
        %v1190 = vshrl.u32 %v1189, 7
        %v1191 = vsub.s32 %v742, %v1190
        %v1192 = vrot.slane %v1113, %v1191
        %v1193 = vsel %vm747, %v1192, %v1188
        %v1194 = vlaneseq
        %v1195 = vshrl.u32 %v1194, 7
        %v1196 = vsub.s32 %v737, %v1195
        %v1197 = vrot.slane %v1116, %v1196
        %v1198 = vlaneseq
        %v1199 = vshrl.u32 %v1198, 7
        %v1200 = vsub.s32 %v742, %v1199
        %v1201 = vrot.slane %v1119, %v1200
        %v1202 = vsel %vm747, %v1201, %v1197
        %v1203 = vlaneseq
        %v1204 = vshrl.u32 %v1203, 7
        %v1205 = vsub.s32 %v737, %v1204
        %v1206 = vrot.slane %v1122, %v1205
        %v1207 = vlaneseq
        %v1208 = vshrl.u32 %v1207, 7
        %v1209 = vsub.s32 %v742, %v1208
        %v1210 = vrot.slane %v1125, %v1209
        %v1211 = vsel %vm747, %v1210, %v1206
        %v1212 = vlaneseq
        %v1213 = vshrl.u32 %v1212, 7
        %v1214 = vsub.s32 %v737, %v1213
        %v1215 = vrot.slane %v1128, %v1214
        %v1216 = vlaneseq
        %v1217 = vshrl.u32 %v1216, 7
        %v1218 = vsub.s32 %v742, %v1217
        %v1219 = vrot.slane %v1131, %v1218
        %v1220 = vsel %vm747, %v1219, %v1215
        %v1221 = vsel %vm812, %v1166, %v1157
        %v1222 = vsel %vm814, %v1175, %v1221
        %v1223 = vsel %vm816, %v1184, %v1222
        %v1224 = vsel %vm818, %v1193, %v1223
        %v1225 = vsel %vm820, %v1202, %v1224
        %v1226 = vsel %vm822, %v1211, %v1225
        %v1227 = vsel %vm824, %v1220, %v1226
        %v1229 = vsel %vm1132, %v1227, -1e+30
        %v1230 = vsel %vm828, %v1229, -inf
        %1231 = vmax.xlane.f32.xlu0 %v1230
        %v1232 = vpop.xlane.xlu0 %1231
        %v1233 = vsub.f32 %v1229, %v1232
        %v1234 = vmul.f32 %v1233, 1.442695
        %v1235 = vpow.pop %v1234
        %v1236 = vmul.f32 %v1235, %v325
        %v1237 = vsel %vm828, %v1236, 0.0
        %1238 = vadd.xlane.f32.xlu0 %v1237
        %v1239 = vpop.xlane.xlu0 %1238
        %v1240 = vrcp.pop %v1239
        %v1241 = vmul.f32 %v1236, %v1240
        %v1243 = vsel %vm828, %v1241, 0
        %1245 = vmatprep.subr.mxu0 0.0
        %1246 = vmatpush1.msra.mxu0 %v410
        %1247 = vmatprep.subr.mxu0 0.0
        %1248 = vmatpush1.msra.mxu0 %v415
        %1249 = vmatprep.subr.mxu0 0.0
        %1250 = vmatpush1.msra.mxu0 0.0
        %1251 = vmatprep.subr.mxu0 0.0
        %1252 = vmatpush1.msra.mxu0 0.0
        %1253 = vmatprep.subr.mxu0 0.0
        %1254 = vmatpush1.msra.mxu0 0.0
        %1255 = vmatprep.subr.mxu0 0.0
        %1256 = vmatpush1.msra.mxu0 0.0
        %1257 = vmatprep.subr.mxu0 0.0
        %1258 = vmatpush1.msra.mxu0 0.0
        %1259 = vmatprep.subr.mxu0 0.0
        %1260 = vmatpush1.msra.mxu0 0.0
        %1261 = vmatprep.subr.mxu0 0.0
        %1262 = vmatpush1.msra.mxu0 0.0
        %1263 = vmatprep.subr.mxu0 0.0
        %1264 = vmatpush1.msra.mxu0 0.0
        %1265 = vmatprep.subr.mxu0 0.0
        %1266 = vmatpush1.msra.mxu0 0.0
        %1267 = vmatprep.subr.mxu0 0.0
        %1268 = vmatpush1.msra.mxu0 0.0
        %1269 = vmatprep.subr.mxu0 0.0
        %1270 = vmatpush1.msra.mxu0 0.0
        %1271 = vmatprep.subr.mxu0 0.0
        %1272 = vmatpush1.msra.mxu0 0.0
        %1273 = vmatprep.subr.mxu0 0.0
        %1274 = vmatpush1.msra.mxu0 0.0
        %1275 = vmatprep.subr.mxu0 0.0
        %1276 = vmatpush1.msra.mxu0 0.0
        %1277 = vmatprep.subr.mxu0 0.0
        %1278 = vmatpush1.msra.mxu0 0.0
        %1279 = vmatprep.subr.mxu0 0.0
        %1280 = vmatpush1.msra.mxu0 0.0
        %1281 = vmatprep.subr.mxu0 0.0
        %1282 = vmatpush1.msra.mxu0 0.0
        %1283 = vmatprep.subr.mxu0 0.0
        %1284 = vmatpush1.msra.mxu0 0.0
        %1285 = vmatprep.subr.mxu0 0.0
        %1286 = vmatpush1.msra.mxu0 0.0
        %1287 = vmatprep.subr.mxu0 0.0
        %1288 = vmatpush1.msra.mxu0 0.0
        %1289 = vmatprep.subr.mxu0 0.0
        %1290 = vmatpush1.msra.mxu0 0.0
        %1291 = vmatprep.subr.mxu0 0.0
        %1292 = vmatpush1.msra.mxu0 0.0
        %1293 = vmatprep.subr.mxu0 0.0
        %1294 = vmatpush1.msra.mxu0 0.0
        %1295 = vmatprep.subr.mxu0 0.0
        %1296 = vmatpush1.msra.mxu0 0.0
        %1297 = vmatprep.subr.mxu0 0.0
        %1298 = vmatpush1.msra.mxu0 0.0
        %1299 = vmatprep.subr.mxu0 0.0
        %1300 = vmatpush1.msra.mxu0 0.0
        %1301 = vmatprep.subr.mxu0 0.0
        %1302 = vmatpush1.msra.mxu0 0.0
        %1303 = vmatprep.subr.mxu0 0.0
        %1304 = vmatpush1.msra.mxu0 0.0
        %1305 = vmatprep.subr.mxu0 0.0
        %1306 = vmatpush1.msra.mxu0 0.0
        %1307 = vmatprep.subr.mxu0 0.0
        %1308 = vmatpush1.msra.mxu0 0.0
        %1309 = vmatprep.mubr.f32.mxu0 0.0
        %1310 = vmatmul.mubr.f32.gmra.mrb[0].mxu0 %v1243
        %v1311 = vpop.f32.mrb[0].mxu0
        %v1312 = vadd.f32 0.0, %v1311
        %v1313 = vpop.f32.mrb[0].mxu0
        %1314 = vdwg.mxu0
        %v1315 = vlaneseq
        %v1316 = vshrl.u32 %v1315, 7
        %v1317 = vsub.s32 1, %v1316
        %v1318 = vrot.slane %v326, %v1317
        %v1319 = vadd.f32 %v911, %v1318
        %v1320 = vadd.f32 %v1312, %v1318
        %1321 = vst.msk [vmem:[%s311] sm:$0xff] %vm828, %v840
        %1322 = vst.msk [vmem:[%s311 + $0x8] sm:$0xff] %vm828, %v1241
        %v1323 = vld [vmem:[%s3] sm:$0xff]
        %v1324 = vld [vmem:[%s3 + $0x8] sm:$0xff]
        %v1325 = vld [vmem:[%s3 + $0x10] sm:$0xff]
        %v1326 = vld [vmem:[%s3 + $0x18] sm:$0xff]
        %s1327 = scalar_lea.vmem %s3, 32
        %v1328 = vld [vmem:[%s1327] sm:$0xff]
        %v1329 = vld [vmem:[%s1327 + $0x8] sm:$0xff]
        %v1330 = vld [vmem:[%s1327 + $0x10] sm:$0xff]
        %v1331 = vld [vmem:[%s1327 + $0x18] sm:$0xff]
        %v1332 = vlaneseq
        %v1333 = vshrl.u32 %v1332, 7
        %v1334 = vsub.s32 2, %v1333
        %v1335 = vrot.slane %v326, %v1334
        %v1337 = vsel %vm670, %v1319, 0
        %v1340 = vsel %vm670, %v1320, 0
        %1342 = vmatprep.subr.mxu0 0.0
        %1343 = vmatpush1.msra.mxu0 %v1323
        %1344 = vmatprep.subr.mxu0 0.0
        %1345 = vmatpush1.msra.mxu0 %v1324
        %1346 = vmatprep.subr.mxu0 0.0
        %1347 = vmatpush1.msra.mxu0 %v1325
        %1348 = vmatprep.subr.mxu0 0.0
        %1349 = vmatpush1.msra.mxu0 %v1326
        %1350 = vmatprep.subr.mxu0 0.0
        %1351 = vmatpush1.msra.mxu0 0.0
        %1352 = vmatprep.subr.mxu0 0.0
        %1353 = vmatpush1.msra.mxu0 0.0
        %1354 = vmatprep.subr.mxu0 0.0
        %1355 = vmatpush1.msra.mxu0 0.0
        %1356 = vmatprep.subr.mxu0 0.0
        %1357 = vmatpush1.msra.mxu0 0.0
        %1358 = vmatprep.subr.mxu0 0.0
        %1359 = vmatpush1.msra.mxu0 0.0
        %1360 = vmatprep.subr.mxu0 0.0
        %1361 = vmatpush1.msra.mxu0 0.0
        %1362 = vmatprep.subr.mxu0 0.0
        %1363 = vmatpush1.msra.mxu0 0.0
        %1364 = vmatprep.subr.mxu0 0.0
        %1365 = vmatpush1.msra.mxu0 0.0
        %1366 = vmatprep.subr.mxu0 0.0
        %1367 = vmatpush1.msra.mxu0 0.0
        %1368 = vmatprep.subr.mxu0 0.0
        %1369 = vmatpush1.msra.mxu0 0.0
        %1370 = vmatprep.subr.mxu0 0.0
        %1371 = vmatpush1.msra.mxu0 0.0
        %1372 = vmatprep.subr.mxu0 0.0
        %1373 = vmatpush1.msra.mxu0 0.0
        %1374 = vmatprep.subr.mxu0 0.0
        %1375 = vmatpush1.msra.mxu0 0.0
        %1376 = vmatprep.subr.mxu0 0.0
        %1377 = vmatpush1.msra.mxu0 0.0
        %1378 = vmatprep.subr.mxu0 0.0
        %1379 = vmatpush1.msra.mxu0 0.0
        %1380 = vmatprep.subr.mxu0 0.0
        %1381 = vmatpush1.msra.mxu0 0.0
        %1382 = vmatprep.subr.mxu0 0.0
        %1383 = vmatpush1.msra.mxu0 0.0
        %1384 = vmatprep.subr.mxu0 0.0
        %1385 = vmatpush1.msra.mxu0 0.0
        %1386 = vmatprep.subr.mxu0 0.0
        %1387 = vmatpush1.msra.mxu0 0.0
        %1388 = vmatprep.subr.mxu0 0.0
        %1389 = vmatpush1.msra.mxu0 0.0
        %1390 = vmatprep.subr.mxu0 0.0
        %1391 = vmatpush1.msra.mxu0 0.0
        %1392 = vmatprep.subr.mxu0 0.0
        %1393 = vmatpush1.msra.mxu0 0.0
        %1394 = vmatprep.subr.mxu0 0.0
        %1395 = vmatpush1.msra.mxu0 0.0
        %1396 = vmatprep.subr.mxu0 0.0
        %1397 = vmatpush1.msra.mxu0 0.0
        %1398 = vmatprep.subr.mxu0 0.0
        %1399 = vmatpush1.msra.mxu0 0.0
        %1400 = vmatprep.subr.mxu0 0.0
        %1401 = vmatpush1.msra.mxu0 0.0
        %1402 = vmatprep.subr.mxu0 0.0
        %1403 = vmatpush1.msra.mxu0 0.0
        %1404 = vmatprep.subr.mxu0 0.0
        %1405 = vmatpush1.msra.mxu0 0.0
        %1406 = vmatprep.mubr.f32.mxu0 0.0
        %1407 = vmatmul.mubr.f32.gmra.mrb[0].mxu0 %v1337
        %v1408 = vpop.f32.mrb[0].mxu0
        %v1409 = vadd.f32 %v1335, %v1408
        %v1410 = vpop.f32.mrb[0].mxu0
        %1411 = vmatprep.mubr.f32.mxu0 0.0
        %1412 = vmatmul.mubr.f32.gmra.mrb[0].mxu0 %v1340
        %v1413 = vpop.f32.mrb[0].mxu0
        %v1414 = vadd.f32 %v1335, %v1413
        %v1415 = vpop.f32.mrb[0].mxu0
        %1416 = vdwg.mxu0
        %v1417 = vlaneseq
        %v1418 = vshrl.u32 %v1417, 7
        %v1419 = vsub.s32 3, %v1418
        %v1420 = vrot.slane %v326, %v1419
        %1421 = vmatprep.subr.mxu0 0.0
        %1422 = vmatpush1.msra.mxu0 %v1328
        %1423 = vmatprep.subr.mxu0 0.0
        %1424 = vmatpush1.msra.mxu0 %v1329
        %1425 = vmatprep.subr.mxu0 0.0
        %1426 = vmatpush1.msra.mxu0 %v1330
        %1427 = vmatprep.subr.mxu0 0.0
        %1428 = vmatpush1.msra.mxu0 %v1331
        %1429 = vmatprep.subr.mxu0 0.0
        %1430 = vmatpush1.msra.mxu0 0.0
        %1431 = vmatprep.subr.mxu0 0.0
        %1432 = vmatpush1.msra.mxu0 0.0
        %1433 = vmatprep.subr.mxu0 0.0
        %1434 = vmatpush1.msra.mxu0 0.0
        %1435 = vmatprep.subr.mxu0 0.0
        %1436 = vmatpush1.msra.mxu0 0.0
        %1437 = vmatprep.subr.mxu0 0.0
        %1438 = vmatpush1.msra.mxu0 0.0
        %1439 = vmatprep.subr.mxu0 0.0
        %1440 = vmatpush1.msra.mxu0 0.0
        %1441 = vmatprep.subr.mxu0 0.0
        %1442 = vmatpush1.msra.mxu0 0.0
        %1443 = vmatprep.subr.mxu0 0.0
        %1444 = vmatpush1.msra.mxu0 0.0
        %1445 = vmatprep.subr.mxu0 0.0
        %1446 = vmatpush1.msra.mxu0 0.0
        %1447 = vmatprep.subr.mxu0 0.0
        %1448 = vmatpush1.msra.mxu0 0.0
        %1449 = vmatprep.subr.mxu0 0.0
        %1450 = vmatpush1.msra.mxu0 0.0
        %1451 = vmatprep.subr.mxu0 0.0
        %1452 = vmatpush1.msra.mxu0 0.0
        %1453 = vmatprep.subr.mxu0 0.0
        %1454 = vmatpush1.msra.mxu0 0.0
        %1455 = vmatprep.subr.mxu0 0.0
        %1456 = vmatpush1.msra.mxu0 0.0
        %1457 = vmatprep.subr.mxu0 0.0
        %1458 = vmatpush1.msra.mxu0 0.0
        %1459 = vmatprep.subr.mxu0 0.0
        %1460 = vmatpush1.msra.mxu0 0.0
        %1461 = vmatprep.subr.mxu0 0.0
        %1462 = vmatpush1.msra.mxu0 0.0
        %1463 = vmatprep.subr.mxu0 0.0
        %1464 = vmatpush1.msra.mxu0 0.0
        %1465 = vmatprep.subr.mxu0 0.0
        %1466 = vmatpush1.msra.mxu0 0.0
        %1467 = vmatprep.subr.mxu0 0.0
        %1468 = vmatpush1.msra.mxu0 0.0
        %1469 = vmatprep.subr.mxu0 0.0
        %1470 = vmatpush1.msra.mxu0 0.0
        %1471 = vmatprep.subr.mxu0 0.0
        %1472 = vmatpush1.msra.mxu0 0.0
        %1473 = vmatprep.subr.mxu0 0.0
        %1474 = vmatpush1.msra.mxu0 0.0
        %1475 = vmatprep.subr.mxu0 0.0
        %1476 = vmatpush1.msra.mxu0 0.0
        %1477 = vmatprep.subr.mxu0 0.0
        %1478 = vmatpush1.msra.mxu0 0.0
        %1479 = vmatprep.subr.mxu0 0.0
        %1480 = vmatpush1.msra.mxu0 0.0
        %1481 = vmatprep.subr.mxu0 0.0
        %1482 = vmatpush1.msra.mxu0 0.0
        %1483 = vmatprep.subr.mxu0 0.0
        %1484 = vmatpush1.msra.mxu0 0.0
        %1485 = vmatprep.mubr.f32.mxu0 0.0
        %1486 = vmatmul.mubr.f32.gmra.mrb[0].mxu0 %v1337
        %v1487 = vpop.f32.mrb[0].mxu0
        %v1488 = vadd.f32 %v1420, %v1487
        %v1489 = vpop.f32.mrb[0].mxu0
        %1490 = vmatprep.mubr.f32.mxu0 0.0
        %1491 = vmatmul.mubr.f32.gmra.mrb[0].mxu0 %v1340
        %v1492 = vpop.f32.mrb[0].mxu0
        %v1493 = vadd.f32 %v1420, %v1492
        %v1494 = vpop.f32.mrb[0].mxu0
        %1495 = vdwg.mxu0
        %v1497 = vcombine.high %v1488, %v1488
        %v1499 = vunpack.c.l.s4 1966171168
        %v1500 = vunpack.c.0.s8 %v1499
        %v1501 = vlaneseq
        %v1502 = vshrl.u32 %v1501, 7
        %v1503 = vsub.s32 %v1500, %v1502
        %v1504 = vrot.slane %v1488, %v1503
        %v1506 = vunpack.c.l.s4 1966171168
        %v1507 = vunpack.c.0.s8 %v1506
        %v1508 = vlaneseq
        %v1509 = vshrl.u32 %v1508, 7
        %v1510 = vsub.s32 %v1507, %v1509
        %v1511 = vrot.slane %v1497, %v1510
        %v1512 = vcombine.high %v1504, %v1504
        %v1513 = vcombine.high %v1511, %v1511
        %v1515 = vunpack.c.l.s4 1966171168
        %v1516 = vunpack.c.0.s8 %v1515
        %v1517 = vlaneseq
        %v1518 = vshrl.u32 %v1517, 7
        %v1519 = vsub.s32 %v1516, %v1518
        %v1520 = vrot.slane %v1504, %v1519
        %v1522 = vunpack.c.l.s4 1966171168
        %v1523 = vunpack.c.0.s8 %v1522
        %v1524 = vlaneseq
        %v1525 = vshrl.u32 %v1524, 7
        %v1526 = vsub.s32 %v1523, %v1525
        %v1527 = vrot.slane %v1511, %v1526
        %v1529 = vunpack.c.l.s4 1966171168
        %v1530 = vunpack.c.0.s8 %v1529
        %v1531 = vlaneseq
        %v1532 = vshrl.u32 %v1531, 7
        %v1533 = vsub.s32 %v1530, %v1532
        %v1534 = vrot.slane %v1512, %v1533
        %v1536 = vunpack.c.l.s4 1966171168
        %v1537 = vunpack.c.0.s8 %v1536
        %v1538 = vlaneseq
        %v1539 = vshrl.u32 %v1538, 7
        %v1540 = vsub.s32 %v1537, %v1539
        %v1541 = vrot.slane %v1513, %v1540
        %v1542 = vcombine.high %v1520, %v1520
        %v1543 = vcombine.high %v1527, %v1527
        %v1544 = vcombine.high %v1534, %v1534
        %v1545 = vcombine.high %v1541, %v1541
        %v1546 = vlaneseq
        %v1547 = vshrl.u32 %v1546, 7
        %v1548 = vsub.s32 0, %v1547
        %v1549 = vrot.slane %v1520, %v1548
        %v1550 = vlaneseq
        %v1551 = vshrl.u32 %v1550, 7
        %v1552 = vsub.s32 0, %v1551
        %v1553 = vrot.slane %v1534, %v1552
        %v1554 = vlaneseq
        %v1555 = vshrl.u32 %v1554, 7
        %v1556 = vsub.s32 0, %v1555
        %v1557 = vrot.slane %v1542, %v1556
        %v1558 = vlaneseq
        %v1559 = vshrl.u32 %v1558, 7
        %v1560 = vsub.s32 0, %v1559
        %v1561 = vrot.slane %v1544, %v1560
        %v1562 = vlaneseq
        %v1563 = vshrl.u32 %v1562, 7
        %v1564 = vsub.s32 0, %v1563
        %v1565 = vrot.slane %v1527, %v1564
        %v1566 = vlaneseq
        %v1567 = vshrl.u32 %v1566, 7
        %v1568 = vsub.s32 0, %v1567
        %v1569 = vrot.slane %v1541, %v1568
        %v1570 = vlaneseq
        %v1571 = vshrl.u32 %v1570, 7
        %v1572 = vsub.s32 0, %v1571
        %v1573 = vrot.slane %v1543, %v1572
        %v1574 = vlaneseq
        %v1575 = vshrl.u32 %v1574, 7
        %v1576 = vsub.s32 0, %v1575
        %v1577 = vrot.slane %v1545, %v1576
        %v1586 = vadd.f32 %v1549, %v1409
        %v1587 = vadd.f32 %v1549, %v1414
        %v1588 = vadd.f32 %v1553, %v1409
        %v1589 = vadd.f32 %v1553, %v1414
        %v1590 = vadd.f32 %v1557, %v1409
        %v1591 = vadd.f32 %v1557, %v1414
        %v1592 = vadd.f32 %v1561, %v1409
        %v1593 = vadd.f32 %v1561, %v1414
        %v1594 = vadd.f32 %v1565, %v1409
        %v1595 = vadd.f32 %v1565, %v1414
        %v1596 = vadd.f32 %v1569, %v1409
        %v1597 = vadd.f32 %v1569, %v1414
        %v1598 = vadd.f32 %v1573, %v1409
        %v1599 = vadd.f32 %v1573, %v1414
        %v1600 = vadd.f32 %v1577, %v1409
        %v1601 = vadd.f32 %v1577, %v1414
        %vm1602 = vcmp.gt.f32.partialorder %v1586, 0.0
        %vm1603 = vcmp.gt.f32.partialorder %v1587, 0.0
        %vm1604 = vcmp.gt.f32.partialorder %v1588, 0.0
        %vm1605 = vcmp.gt.f32.partialorder %v1589, 0.0
        %vm1606 = vcmp.gt.f32.partialorder %v1590, 0.0
        %vm1607 = vcmp.gt.f32.partialorder %v1591, 0.0
        %vm1608 = vcmp.gt.f32.partialorder %v1592, 0.0
        %vm1609 = vcmp.gt.f32.partialorder %v1593, 0.0
        %vm1610 = vcmp.gt.f32.partialorder %v1594, 0.0
        %vm1611 = vcmp.gt.f32.partialorder %v1595, 0.0
        %vm1612 = vcmp.gt.f32.partialorder %v1596, 0.0
        %vm1613 = vcmp.gt.f32.partialorder %v1597, 0.0
        %vm1614 = vcmp.gt.f32.partialorder %v1598, 0.0
        %vm1615 = vcmp.gt.f32.partialorder %v1599, 0.0
        %vm1616 = vcmp.gt.f32.partialorder %v1600, 0.0
        %vm1617 = vcmp.gt.f32.partialorder %v1601, 0.0
        %v1618 = vmul.f32 %v1586, 0.2
        %v1619 = vmul.f32 %v1587, 0.2
        %v1620 = vmul.f32 %v1588, 0.2
        %v1621 = vmul.f32 %v1589, 0.2
        %v1622 = vmul.f32 %v1590, 0.2
        %v1623 = vmul.f32 %v1591, 0.2
        %v1624 = vmul.f32 %v1592, 0.2
        %v1625 = vmul.f32 %v1593, 0.2
        %v1626 = vmul.f32 %v1594, 0.2
        %v1627 = vmul.f32 %v1595, 0.2
        %v1628 = vmul.f32 %v1596, 0.2
        %v1629 = vmul.f32 %v1597, 0.2
        %v1630 = vmul.f32 %v1598, 0.2
        %v1631 = vmul.f32 %v1599, 0.2
        %v1632 = vmul.f32 %v1600, 0.2
        %v1633 = vmul.f32 %v1601, 0.2
        %v1634 = vsel %vm1602, %v1586, %v1618
        %v1635 = vsel %vm1603, %v1587, %v1619
        %v1636 = vsel %vm1604, %v1588, %v1620
        %v1637 = vsel %vm1605, %v1589, %v1621
        %v1638 = vsel %vm1606, %v1590, %v1622
        %v1639 = vsel %vm1607, %v1591, %v1623
        %v1640 = vsel %vm1608, %v1592, %v1624
        %v1641 = vsel %vm1609, %v1593, %v1625
        %v1642 = vsel %vm1610, %v1594, %v1626
        %v1643 = vsel %vm1611, %v1595, %v1627
        %v1644 = vsel %vm1612, %v1596, %v1628
        %v1645 = vsel %vm1613, %v1597, %v1629
        %v1646 = vsel %vm1614, %v1598, %v1630
        %v1647 = vsel %vm1615, %v1599, %v1631
        %v1648 = vsel %vm1616, %v1600, %v1632
        %v1649 = vsel %vm1617, %v1601, %v1633
        %v1650 = vlaneseq
        %v1651 = vshrl.u32 %v1650, 7
        %v1652 = vsub.s32 4, %v1651
        %v1653 = vrot.slane %v326, %v1652
        %v1654 = vmul.f32 %v1634, %v1653
        %v1655 = vmul.f32 %v1635, %v1653
        %v1656 = vmul.f32 %v1636, %v1653
        %v1657 = vmul.f32 %v1637, %v1653
        %v1658 = vmul.f32 %v1638, %v1653
        %v1659 = vmul.f32 %v1639, %v1653
        %v1660 = vmul.f32 %v1640, %v1653
        %v1661 = vmul.f32 %v1641, %v1653
        %v1662 = vmul.f32 %v1642, %v1653
        %v1663 = vmul.f32 %v1643, %v1653
        %v1664 = vmul.f32 %v1644, %v1653
        %v1665 = vmul.f32 %v1645, %v1653
        %v1666 = vmul.f32 %v1646, %v1653
        %v1667 = vmul.f32 %v1647, %v1653
        %v1668 = vmul.f32 %v1648, %v1653
        %v1669 = vmul.f32 %v1649, %v1653
        %v1670 = vsel %vm670, %v1654, 0.0
        %1671 = vadd.xlane.f32.xlu0 %v1670
        %v1672 = vpop.xlane.xlu0 %1671
        %v1673 = vsel %vm670, %v1655, 0.0
        %1674 = vadd.xlane.f32.xlu0 %v1673
        %v1675 = vpop.xlane.xlu0 %1674
        %v1676 = vsel %vm670, %v1656, 0.0
        %1677 = vadd.xlane.f32.xlu0 %v1676
        %v1678 = vpop.xlane.xlu0 %1677
        %v1679 = vsel %vm670, %v1657, 0.0
        %1680 = vadd.xlane.f32.xlu0 %v1679
        %v1681 = vpop.xlane.xlu0 %1680
        %v1682 = vsel %vm670, %v1658, 0.0
        %1683 = vadd.xlane.f32.xlu0 %v1682
        %v1684 = vpop.xlane.xlu0 %1683
        %v1685 = vsel %vm670, %v1659, 0.0
        %1686 = vadd.xlane.f32.xlu0 %v1685
        %v1687 = vpop.xlane.xlu0 %1686
        %v1688 = vsel %vm670, %v1660, 0.0
        %1689 = vadd.xlane.f32.xlu0 %v1688
        %v1690 = vpop.xlane.xlu0 %1689
        %v1691 = vsel %vm670, %v1661, 0.0
        %1692 = vadd.xlane.f32.xlu0 %v1691
        %v1693 = vpop.xlane.xlu0 %1692
        %v1694 = vsel %vm670, %v1662, 0.0
        %1695 = vadd.xlane.f32.xlu0 %v1694
        %v1696 = vpop.xlane.xlu0 %1695
        %v1697 = vsel %vm670, %v1663, 0.0
        %1698 = vadd.xlane.f32.xlu0 %v1697
        %v1699 = vpop.xlane.xlu0 %1698
        %v1700 = vsel %vm670, %v1664, 0.0
        %1701 = vadd.xlane.f32.xlu0 %v1700
        %v1702 = vpop.xlane.xlu0 %1701
        %v1703 = vsel %vm670, %v1665, 0.0
        %1704 = vadd.xlane.f32.xlu0 %v1703
        %v1705 = vpop.xlane.xlu0 %1704
        %v1706 = vsel %vm670, %v1666, 0.0
        %1707 = vadd.xlane.f32.xlu0 %v1706
        %v1708 = vpop.xlane.xlu0 %1707
        %v1709 = vsel %vm670, %v1667, 0.0
        %1710 = vadd.xlane.f32.xlu0 %v1709
        %v1711 = vpop.xlane.xlu0 %1710
        %v1712 = vsel %vm670, %v1668, 0.0
        %1713 = vadd.xlane.f32.xlu0 %v1712
        %v1714 = vpop.xlane.xlu0 %1713
        %v1715 = vsel %vm670, %v1669, 0.0
        %1716 = vadd.xlane.f32.xlu0 %v1715
        %v1717 = vpop.xlane.xlu0 %1716
        %v1734 = vlaneseq
        %v1735 = vshrl.u32 %v1734, 7
        %v1736 = vsub.s32 %v737, %v1735
        %v1737 = vrot.slane %v1672, %v1736
        %v1738 = vlaneseq
        %v1739 = vshrl.u32 %v1738, 7
        %v1740 = vsub.s32 %v742, %v1739
        %v1741 = vrot.slane %v1675, %v1740
        %v1742 = vsel %vm747, %v1741, %v1737
        %v1743 = vlaneseq
        %v1744 = vshrl.u32 %v1743, 7
        %v1745 = vsub.s32 %v737, %v1744
        %v1746 = vrot.slane %v1678, %v1745
        %v1747 = vlaneseq
        %v1748 = vshrl.u32 %v1747, 7
        %v1749 = vsub.s32 %v742, %v1748
        %v1750 = vrot.slane %v1681, %v1749
        %v1751 = vsel %vm747, %v1750, %v1746
        %v1752 = vlaneseq
        %v1753 = vshrl.u32 %v1752, 7
        %v1754 = vsub.s32 %v737, %v1753
        %v1755 = vrot.slane %v1684, %v1754
        %v1756 = vlaneseq
        %v1757 = vshrl.u32 %v1756, 7
        %v1758 = vsub.s32 %v742, %v1757
        %v1759 = vrot.slane %v1687, %v1758
        %v1760 = vsel %vm747, %v1759, %v1755
        %v1761 = vlaneseq
        %v1762 = vshrl.u32 %v1761, 7
        %v1763 = vsub.s32 %v737, %v1762
        %v1764 = vrot.slane %v1690, %v1763
        %v1765 = vlaneseq
        %v1766 = vshrl.u32 %v1765, 7
        %v1767 = vsub.s32 %v742, %v1766
        %v1768 = vrot.slane %v1693, %v1767
        %v1769 = vsel %vm747, %v1768, %v1764
        %v1770 = vlaneseq
        %v1771 = vshrl.u32 %v1770, 7
        %v1772 = vsub.s32 %v737, %v1771
        %v1773 = vrot.slane %v1696, %v1772
        %v1774 = vlaneseq
        %v1775 = vshrl.u32 %v1774, 7
        %v1776 = vsub.s32 %v742, %v1775
        %v1777 = vrot.slane %v1699, %v1776
        %v1778 = vsel %vm747, %v1777, %v1773
        %v1779 = vlaneseq
        %v1780 = vshrl.u32 %v1779, 7
        %v1781 = vsub.s32 %v737, %v1780
        %v1782 = vrot.slane %v1702, %v1781
        %v1783 = vlaneseq
        %v1784 = vshrl.u32 %v1783, 7
        %v1785 = vsub.s32 %v742, %v1784
        %v1786 = vrot.slane %v1705, %v1785
        %v1787 = vsel %vm747, %v1786, %v1782
        %v1788 = vlaneseq
        %v1789 = vshrl.u32 %v1788, 7
        %v1790 = vsub.s32 %v737, %v1789
        %v1791 = vrot.slane %v1708, %v1790
        %v1792 = vlaneseq
        %v1793 = vshrl.u32 %v1792, 7
        %v1794 = vsub.s32 %v742, %v1793
        %v1795 = vrot.slane %v1711, %v1794
        %v1796 = vsel %vm747, %v1795, %v1791
        %v1797 = vlaneseq
        %v1798 = vshrl.u32 %v1797, 7
        %v1799 = vsub.s32 %v737, %v1798
        %v1800 = vrot.slane %v1714, %v1799
        %v1801 = vlaneseq
        %v1802 = vshrl.u32 %v1801, 7
        %v1803 = vsub.s32 %v742, %v1802
        %v1804 = vrot.slane %v1717, %v1803
        %v1805 = vsel %vm747, %v1804, %v1800
        %v1806 = vsel %vm812, %v1751, %v1742
        %v1807 = vsel %vm814, %v1760, %v1806
        %v1808 = vsel %vm816, %v1769, %v1807
        %v1809 = vsel %vm818, %v1778, %v1808
        %v1810 = vsel %vm820, %v1787, %v1809
        %v1811 = vsel %vm822, %v1796, %v1810
        %v1812 = vsel %vm824, %v1805, %v1811
        %v1814 = vsel %vm719, %v1812, -1e+30
        %v1815 = vsel %vm828, %v1814, -inf
        %1816 = vmax.xlane.f32.xlu0 %v1815
        %v1817 = vpop.xlane.xlu0 %1816
        %v1818 = vsub.f32 %v1814, %v1817
        %v1819 = vmul.f32 %v1818, 1.442695
        %v1820 = vpow.pop %v1819
        %v1821 = vmul.f32 %v1820, %v324
        %v1822 = vsel %vm828, %v1821, 0.0
        %1823 = vadd.xlane.f32.xlu0 %v1822
        %v1824 = vpop.xlane.xlu0 %1823
        %v1825 = vrcp.pop %v1824
        %v1826 = vmul.f32 %v1821, %v1825
        %v1828 = vsel %vm828, %v1826, 0
        %1830 = vmatprep.subr.mxu0 0.0
        %1831 = vmatpush1.msra.mxu0 %v1409
        %1832 = vmatprep.subr.mxu0 0.0
        %1833 = vmatpush1.msra.mxu0 %v1414
        %1834 = vmatprep.subr.mxu0 0.0
        %1835 = vmatpush1.msra.mxu0 0.0
        %1836 = vmatprep.subr.mxu0 0.0
        %1837 = vmatpush1.msra.mxu0 0.0
        %1838 = vmatprep.subr.mxu0 0.0
        %1839 = vmatpush1.msra.mxu0 0.0
        %1840 = vmatprep.subr.mxu0 0.0
        %1841 = vmatpush1.msra.mxu0 0.0
        %1842 = vmatprep.subr.mxu0 0.0
        %1843 = vmatpush1.msra.mxu0 0.0
        %1844 = vmatprep.subr.mxu0 0.0
        %1845 = vmatpush1.msra.mxu0 0.0
        %1846 = vmatprep.subr.mxu0 0.0
        %1847 = vmatpush1.msra.mxu0 0.0
        %1848 = vmatprep.subr.mxu0 0.0
        %1849 = vmatpush1.msra.mxu0 0.0
        %1850 = vmatprep.subr.mxu0 0.0
        %1851 = vmatpush1.msra.mxu0 0.0
        %1852 = vmatprep.subr.mxu0 0.0
        %1853 = vmatpush1.msra.mxu0 0.0
        %1854 = vmatprep.subr.mxu0 0.0
        %1855 = vmatpush1.msra.mxu0 0.0
        %1856 = vmatprep.subr.mxu0 0.0
        %1857 = vmatpush1.msra.mxu0 0.0
        %1858 = vmatprep.subr.mxu0 0.0
        %1859 = vmatpush1.msra.mxu0 0.0
        %1860 = vmatprep.subr.mxu0 0.0
        %1861 = vmatpush1.msra.mxu0 0.0
        %1862 = vmatprep.subr.mxu0 0.0
        %1863 = vmatpush1.msra.mxu0 0.0
        %1864 = vmatprep.subr.mxu0 0.0
        %1865 = vmatpush1.msra.mxu0 0.0
        %1866 = vmatprep.subr.mxu0 0.0
        %1867 = vmatpush1.msra.mxu0 0.0
        %1868 = vmatprep.subr.mxu0 0.0
        %1869 = vmatpush1.msra.mxu0 0.0
        %1870 = vmatprep.subr.mxu0 0.0
        %1871 = vmatpush1.msra.mxu0 0.0
        %1872 = vmatprep.subr.mxu0 0.0
        %1873 = vmatpush1.msra.mxu0 0.0
        %1874 = vmatprep.subr.mxu0 0.0
        %1875 = vmatpush1.msra.mxu0 0.0
        %1876 = vmatprep.subr.mxu0 0.0
        %1877 = vmatpush1.msra.mxu0 0.0
        %1878 = vmatprep.subr.mxu0 0.0
        %1879 = vmatpush1.msra.mxu0 0.0
        %1880 = vmatprep.subr.mxu0 0.0
        %1881 = vmatpush1.msra.mxu0 0.0
        %1882 = vmatprep.subr.mxu0 0.0
        %1883 = vmatpush1.msra.mxu0 0.0
        %1884 = vmatprep.subr.mxu0 0.0
        %1885 = vmatpush1.msra.mxu0 0.0
        %1886 = vmatprep.subr.mxu0 0.0
        %1887 = vmatpush1.msra.mxu0 0.0
        %1888 = vmatprep.subr.mxu0 0.0
        %1889 = vmatpush1.msra.mxu0 0.0
        %1890 = vmatprep.subr.mxu0 0.0
        %1891 = vmatpush1.msra.mxu0 0.0
        %1892 = vmatprep.subr.mxu0 0.0
        %1893 = vmatpush1.msra.mxu0 0.0
        %1894 = vmatprep.mubr.f32.mxu0 0.0
        %1895 = vmatmul.mubr.f32.gmra.mrb[0].mxu0 %v1828
        %v1896 = vpop.f32.mrb[0].mxu0
        %v1897 = vadd.f32 0.0, %v1896
        %v1898 = vpop.f32.mrb[0].mxu0
        %1899 = vdwg.mxu0
        %v1901 = vcombine.high %v1493, %v1493
        %v1903 = vunpack.c.l.s4 1966171168
        %v1904 = vunpack.c.0.s8 %v1903
        %v1905 = vlaneseq
        %v1906 = vshrl.u32 %v1905, 7
        %v1907 = vsub.s32 %v1904, %v1906
        %v1908 = vrot.slane %v1493, %v1907
        %v1910 = vunpack.c.l.s4 1966171168
        %v1911 = vunpack.c.0.s8 %v1910
        %v1912 = vlaneseq
        %v1913 = vshrl.u32 %v1912, 7
        %v1914 = vsub.s32 %v1911, %v1913
        %v1915 = vrot.slane %v1901, %v1914
        %v1916 = vcombine.high %v1908, %v1908
        %v1917 = vcombine.high %v1915, %v1915
        %v1919 = vunpack.c.l.s4 1966171168
        %v1920 = vunpack.c.0.s8 %v1919
        %v1921 = vlaneseq
        %v1922 = vshrl.u32 %v1921, 7
        %v1923 = vsub.s32 %v1920, %v1922
        %v1924 = vrot.slane %v1908, %v1923
        %v1926 = vunpack.c.l.s4 1966171168
        %v1927 = vunpack.c.0.s8 %v1926
        %v1928 = vlaneseq
        %v1929 = vshrl.u32 %v1928, 7
        %v1930 = vsub.s32 %v1927, %v1929
        %v1931 = vrot.slane %v1915, %v1930
        %v1933 = vunpack.c.l.s4 1966171168
        %v1934 = vunpack.c.0.s8 %v1933
        %v1935 = vlaneseq
        %v1936 = vshrl.u32 %v1935, 7
        %v1937 = vsub.s32 %v1934, %v1936
        %v1938 = vrot.slane %v1916, %v1937
        %v1940 = vunpack.c.l.s4 1966171168
        %v1941 = vunpack.c.0.s8 %v1940
        %v1942 = vlaneseq
        %v1943 = vshrl.u32 %v1942, 7
        %v1944 = vsub.s32 %v1941, %v1943
        %v1945 = vrot.slane %v1917, %v1944
        %v1946 = vcombine.high %v1924, %v1924
        %v1947 = vcombine.high %v1931, %v1931
        %v1948 = vcombine.high %v1938, %v1938
        %v1949 = vcombine.high %v1945, %v1945
        %v1950 = vlaneseq
        %v1951 = vshrl.u32 %v1950, 7
        %v1952 = vsub.s32 0, %v1951
        %v1953 = vrot.slane %v1924, %v1952
        %v1954 = vlaneseq
        %v1955 = vshrl.u32 %v1954, 7
        %v1956 = vsub.s32 0, %v1955
        %v1957 = vrot.slane %v1938, %v1956
        %v1958 = vlaneseq
        %v1959 = vshrl.u32 %v1958, 7
        %v1960 = vsub.s32 0, %v1959
        %v1961 = vrot.slane %v1946, %v1960
        %v1962 = vlaneseq
        %v1963 = vshrl.u32 %v1962, 7
        %v1964 = vsub.s32 0, %v1963
        %v1965 = vrot.slane %v1948, %v1964
        %v1966 = vlaneseq
        %v1967 = vshrl.u32 %v1966, 7
        %v1968 = vsub.s32 0, %v1967
        %v1969 = vrot.slane %v1931, %v1968
        %v1970 = vlaneseq
        %v1971 = vshrl.u32 %v1970, 7
        %v1972 = vsub.s32 0, %v1971
        %v1973 = vrot.slane %v1945, %v1972
        %v1974 = vlaneseq
        %v1975 = vshrl.u32 %v1974, 7
        %v1976 = vsub.s32 0, %v1975
        %v1977 = vrot.slane %v1947, %v1976
        %v1978 = vlaneseq
        %v1979 = vshrl.u32 %v1978, 7
        %v1980 = vsub.s32 0, %v1979
        %v1981 = vrot.slane %v1949, %v1980
        %v1990 = vadd.f32 %v1953, %v1409
        %v1991 = vadd.f32 %v1953, %v1414
        %v1992 = vadd.f32 %v1957, %v1409
        %v1993 = vadd.f32 %v1957, %v1414
        %v1994 = vadd.f32 %v1961, %v1409
        %v1995 = vadd.f32 %v1961, %v1414
        %v1996 = vadd.f32 %v1965, %v1409
        %v1997 = vadd.f32 %v1965, %v1414
        %v1998 = vadd.f32 %v1969, %v1409
        %v1999 = vadd.f32 %v1969, %v1414
        %v2000 = vadd.f32 %v1973, %v1409
        %v2001 = vadd.f32 %v1973, %v1414
        %v2002 = vadd.f32 %v1977, %v1409
        %v2003 = vadd.f32 %v1977, %v1414
        %v2004 = vadd.f32 %v1981, %v1409
        %v2005 = vadd.f32 %v1981, %v1414
        %vm2006 = vcmp.gt.f32.partialorder %v1990, 0.0
        %vm2007 = vcmp.gt.f32.partialorder %v1991, 0.0
        %vm2008 = vcmp.gt.f32.partialorder %v1992, 0.0
        %vm2009 = vcmp.gt.f32.partialorder %v1993, 0.0
        %vm2010 = vcmp.gt.f32.partialorder %v1994, 0.0
        %vm2011 = vcmp.gt.f32.partialorder %v1995, 0.0
        %vm2012 = vcmp.gt.f32.partialorder %v1996, 0.0
        %vm2013 = vcmp.gt.f32.partialorder %v1997, 0.0
        %vm2014 = vcmp.gt.f32.partialorder %v1998, 0.0
        %vm2015 = vcmp.gt.f32.partialorder %v1999, 0.0
        %vm2016 = vcmp.gt.f32.partialorder %v2000, 0.0
        %vm2017 = vcmp.gt.f32.partialorder %v2001, 0.0
        %vm2018 = vcmp.gt.f32.partialorder %v2002, 0.0
        %vm2019 = vcmp.gt.f32.partialorder %v2003, 0.0
        %vm2020 = vcmp.gt.f32.partialorder %v2004, 0.0
        %vm2021 = vcmp.gt.f32.partialorder %v2005, 0.0
        %v2022 = vmul.f32 %v1990, 0.2
        %v2023 = vmul.f32 %v1991, 0.2
        %v2024 = vmul.f32 %v1992, 0.2
        %v2025 = vmul.f32 %v1993, 0.2
        %v2026 = vmul.f32 %v1994, 0.2
        %v2027 = vmul.f32 %v1995, 0.2
        %v2028 = vmul.f32 %v1996, 0.2
        %v2029 = vmul.f32 %v1997, 0.2
        %v2030 = vmul.f32 %v1998, 0.2
        %v2031 = vmul.f32 %v1999, 0.2
        %v2032 = vmul.f32 %v2000, 0.2
        %v2033 = vmul.f32 %v2001, 0.2
        %v2034 = vmul.f32 %v2002, 0.2
        %v2035 = vmul.f32 %v2003, 0.2
        %v2036 = vmul.f32 %v2004, 0.2
        %v2037 = vmul.f32 %v2005, 0.2
        %v2038 = vsel %vm2006, %v1990, %v2022
        %v2039 = vsel %vm2007, %v1991, %v2023
        %v2040 = vsel %vm2008, %v1992, %v2024
        %v2041 = vsel %vm2009, %v1993, %v2025
        %v2042 = vsel %vm2010, %v1994, %v2026
        %v2043 = vsel %vm2011, %v1995, %v2027
        %v2044 = vsel %vm2012, %v1996, %v2028
        %v2045 = vsel %vm2013, %v1997, %v2029
        %v2046 = vsel %vm2014, %v1998, %v2030
        %v2047 = vsel %vm2015, %v1999, %v2031
        %v2048 = vsel %vm2016, %v2000, %v2032
        %v2049 = vsel %vm2017, %v2001, %v2033
        %v2050 = vsel %vm2018, %v2002, %v2034
        %v2051 = vsel %vm2019, %v2003, %v2035
        %v2052 = vsel %vm2020, %v2004, %v2036
        %v2053 = vsel %vm2021, %v2005, %v2037
        %v2054 = vmul.f32 %v2038, %v1653
        %v2055 = vmul.f32 %v2039, %v1653
        %v2056 = vmul.f32 %v2040, %v1653
        %v2057 = vmul.f32 %v2041, %v1653
        %v2058 = vmul.f32 %v2042, %v1653
        %v2059 = vmul.f32 %v2043, %v1653
        %v2060 = vmul.f32 %v2044, %v1653
        %v2061 = vmul.f32 %v2045, %v1653
        %v2062 = vmul.f32 %v2046, %v1653
        %v2063 = vmul.f32 %v2047, %v1653
        %v2064 = vmul.f32 %v2048, %v1653
        %v2065 = vmul.f32 %v2049, %v1653
        %v2066 = vmul.f32 %v2050, %v1653
        %v2067 = vmul.f32 %v2051, %v1653
        %v2068 = vmul.f32 %v2052, %v1653
        %v2069 = vmul.f32 %v2053, %v1653
        %v2070 = vsel %vm670, %v2054, 0.0
        %2071 = vadd.xlane.f32.xlu0 %v2070
        %v2072 = vpop.xlane.xlu0 %2071
        %v2073 = vsel %vm670, %v2055, 0.0
        %2074 = vadd.xlane.f32.xlu0 %v2073
        %v2075 = vpop.xlane.xlu0 %2074
        %v2076 = vsel %vm670, %v2056, 0.0
        %2077 = vadd.xlane.f32.xlu0 %v2076
        %v2078 = vpop.xlane.xlu0 %2077
        %v2079 = vsel %vm670, %v2057, 0.0
        %2080 = vadd.xlane.f32.xlu0 %v2079
        %v2081 = vpop.xlane.xlu0 %2080
        %v2082 = vsel %vm670, %v2058, 0.0
        %2083 = vadd.xlane.f32.xlu0 %v2082
        %v2084 = vpop.xlane.xlu0 %2083
        %v2085 = vsel %vm670, %v2059, 0.0
        %2086 = vadd.xlane.f32.xlu0 %v2085
        %v2087 = vpop.xlane.xlu0 %2086
        %v2088 = vsel %vm670, %v2060, 0.0
        %2089 = vadd.xlane.f32.xlu0 %v2088
        %v2090 = vpop.xlane.xlu0 %2089
        %v2091 = vsel %vm670, %v2061, 0.0
        %2092 = vadd.xlane.f32.xlu0 %v2091
        %v2093 = vpop.xlane.xlu0 %2092
        %v2094 = vsel %vm670, %v2062, 0.0
        %2095 = vadd.xlane.f32.xlu0 %v2094
        %v2096 = vpop.xlane.xlu0 %2095
        %v2097 = vsel %vm670, %v2063, 0.0
        %2098 = vadd.xlane.f32.xlu0 %v2097
        %v2099 = vpop.xlane.xlu0 %2098
        %v2100 = vsel %vm670, %v2064, 0.0
        %2101 = vadd.xlane.f32.xlu0 %v2100
        %v2102 = vpop.xlane.xlu0 %2101
        %v2103 = vsel %vm670, %v2065, 0.0
        %2104 = vadd.xlane.f32.xlu0 %v2103
        %v2105 = vpop.xlane.xlu0 %2104
        %v2106 = vsel %vm670, %v2066, 0.0
        %2107 = vadd.xlane.f32.xlu0 %v2106
        %v2108 = vpop.xlane.xlu0 %2107
        %v2109 = vsel %vm670, %v2067, 0.0
        %2110 = vadd.xlane.f32.xlu0 %v2109
        %v2111 = vpop.xlane.xlu0 %2110
        %v2112 = vsel %vm670, %v2068, 0.0
        %2113 = vadd.xlane.f32.xlu0 %v2112
        %v2114 = vpop.xlane.xlu0 %2113
        %v2115 = vsel %vm670, %v2069, 0.0
        %2116 = vadd.xlane.f32.xlu0 %v2115
        %v2117 = vpop.xlane.xlu0 %2116
        %v2134 = vlaneseq
        %v2135 = vshrl.u32 %v2134, 7
        %v2136 = vsub.s32 %v737, %v2135
        %v2137 = vrot.slane %v2072, %v2136
        %v2138 = vlaneseq
        %v2139 = vshrl.u32 %v2138, 7
        %v2140 = vsub.s32 %v742, %v2139
        %v2141 = vrot.slane %v2075, %v2140
        %v2142 = vsel %vm747, %v2141, %v2137
        %v2143 = vlaneseq
        %v2144 = vshrl.u32 %v2143, 7
        %v2145 = vsub.s32 %v737, %v2144
        %v2146 = vrot.slane %v2078, %v2145
        %v2147 = vlaneseq
        %v2148 = vshrl.u32 %v2147, 7
        %v2149 = vsub.s32 %v742, %v2148
        %v2150 = vrot.slane %v2081, %v2149
        %v2151 = vsel %vm747, %v2150, %v2146
        %v2152 = vlaneseq
        %v2153 = vshrl.u32 %v2152, 7
        %v2154 = vsub.s32 %v737, %v2153
        %v2155 = vrot.slane %v2084, %v2154
        %v2156 = vlaneseq
        %v2157 = vshrl.u32 %v2156, 7
        %v2158 = vsub.s32 %v742, %v2157
        %v2159 = vrot.slane %v2087, %v2158
        %v2160 = vsel %vm747, %v2159, %v2155
        %v2161 = vlaneseq
        %v2162 = vshrl.u32 %v2161, 7
        %v2163 = vsub.s32 %v737, %v2162
        %v2164 = vrot.slane %v2090, %v2163
        %v2165 = vlaneseq
        %v2166 = vshrl.u32 %v2165, 7
        %v2167 = vsub.s32 %v742, %v2166
        %v2168 = vrot.slane %v2093, %v2167
        %v2169 = vsel %vm747, %v2168, %v2164
        %v2170 = vlaneseq
        %v2171 = vshrl.u32 %v2170, 7
        %v2172 = vsub.s32 %v737, %v2171
        %v2173 = vrot.slane %v2096, %v2172
        %v2174 = vlaneseq
        %v2175 = vshrl.u32 %v2174, 7
        %v2176 = vsub.s32 %v742, %v2175
        %v2177 = vrot.slane %v2099, %v2176
        %v2178 = vsel %vm747, %v2177, %v2173
        %v2179 = vlaneseq
        %v2180 = vshrl.u32 %v2179, 7
        %v2181 = vsub.s32 %v737, %v2180
        %v2182 = vrot.slane %v2102, %v2181
        %v2183 = vlaneseq
        %v2184 = vshrl.u32 %v2183, 7
        %v2185 = vsub.s32 %v742, %v2184
        %v2186 = vrot.slane %v2105, %v2185
        %v2187 = vsel %vm747, %v2186, %v2182
        %v2188 = vlaneseq
        %v2189 = vshrl.u32 %v2188, 7
        %v2190 = vsub.s32 %v737, %v2189
        %v2191 = vrot.slane %v2108, %v2190
        %v2192 = vlaneseq
        %v2193 = vshrl.u32 %v2192, 7
        %v2194 = vsub.s32 %v742, %v2193
        %v2195 = vrot.slane %v2111, %v2194
        %v2196 = vsel %vm747, %v2195, %v2191
        %v2197 = vlaneseq
        %v2198 = vshrl.u32 %v2197, 7
        %v2199 = vsub.s32 %v737, %v2198
        %v2200 = vrot.slane %v2114, %v2199
        %v2201 = vlaneseq
        %v2202 = vshrl.u32 %v2201, 7
        %v2203 = vsub.s32 %v742, %v2202
        %v2204 = vrot.slane %v2117, %v2203
        %v2205 = vsel %vm747, %v2204, %v2200
        %v2206 = vsel %vm812, %v2151, %v2142
        %v2207 = vsel %vm814, %v2160, %v2206
        %v2208 = vsel %vm816, %v2169, %v2207
        %v2209 = vsel %vm818, %v2178, %v2208
        %v2210 = vsel %vm820, %v2187, %v2209
        %v2211 = vsel %vm822, %v2196, %v2210
        %v2212 = vsel %vm824, %v2205, %v2211
        %v2214 = vsel %vm1132, %v2212, -1e+30
        %v2215 = vsel %vm828, %v2214, -inf
        %2216 = vmax.xlane.f32.xlu0 %v2215
        %v2217 = vpop.xlane.xlu0 %2216
        %v2218 = vsub.f32 %v2214, %v2217
        %v2219 = vmul.f32 %v2218, 1.442695
        %v2220 = vpow.pop %v2219
        %v2221 = vmul.f32 %v2220, %v325
        %v2222 = vsel %vm828, %v2221, 0.0
        %2223 = vadd.xlane.f32.xlu0 %v2222
        %v2224 = vpop.xlane.xlu0 %2223
        %v2225 = vrcp.pop %v2224
        %v2226 = vmul.f32 %v2221, %v2225
        %v2228 = vsel %vm828, %v2226, 0
        %2230 = vmatprep.subr.mxu0 0.0
        %2231 = vmatpush1.msra.mxu0 %v1409
        %2232 = vmatprep.subr.mxu0 0.0
        %2233 = vmatpush1.msra.mxu0 %v1414
        %2234 = vmatprep.subr.mxu0 0.0
        %2235 = vmatpush1.msra.mxu0 0.0
        %2236 = vmatprep.subr.mxu0 0.0
        %2237 = vmatpush1.msra.mxu0 0.0
        %2238 = vmatprep.subr.mxu0 0.0
        %2239 = vmatpush1.msra.mxu0 0.0
        %2240 = vmatprep.subr.mxu0 0.0
        %2241 = vmatpush1.msra.mxu0 0.0
        %2242 = vmatprep.subr.mxu0 0.0
        %2243 = vmatpush1.msra.mxu0 0.0
        %2244 = vmatprep.subr.mxu0 0.0
        %2245 = vmatpush1.msra.mxu0 0.0
        %2246 = vmatprep.subr.mxu0 0.0
        %2247 = vmatpush1.msra.mxu0 0.0
        %2248 = vmatprep.subr.mxu0 0.0
        %2249 = vmatpush1.msra.mxu0 0.0
        %2250 = vmatprep.subr.mxu0 0.0
        %2251 = vmatpush1.msra.mxu0 0.0
        %2252 = vmatprep.subr.mxu0 0.0
        %2253 = vmatpush1.msra.mxu0 0.0
        %2254 = vmatprep.subr.mxu0 0.0
        %2255 = vmatpush1.msra.mxu0 0.0
        %2256 = vmatprep.subr.mxu0 0.0
        %2257 = vmatpush1.msra.mxu0 0.0
        %2258 = vmatprep.subr.mxu0 0.0
        %2259 = vmatpush1.msra.mxu0 0.0
        %2260 = vmatprep.subr.mxu0 0.0
        %2261 = vmatpush1.msra.mxu0 0.0
        %2262 = vmatprep.subr.mxu0 0.0
        %2263 = vmatpush1.msra.mxu0 0.0
        %2264 = vmatprep.subr.mxu0 0.0
        %2265 = vmatpush1.msra.mxu0 0.0
        %2266 = vmatprep.subr.mxu0 0.0
        %2267 = vmatpush1.msra.mxu0 0.0
        %2268 = vmatprep.subr.mxu0 0.0
        %2269 = vmatpush1.msra.mxu0 0.0
        %2270 = vmatprep.subr.mxu0 0.0
        %2271 = vmatpush1.msra.mxu0 0.0
        %2272 = vmatprep.subr.mxu0 0.0
        %2273 = vmatpush1.msra.mxu0 0.0
        %2274 = vmatprep.subr.mxu0 0.0
        %2275 = vmatpush1.msra.mxu0 0.0
        %2276 = vmatprep.subr.mxu0 0.0
        %2277 = vmatpush1.msra.mxu0 0.0
        %2278 = vmatprep.subr.mxu0 0.0
        %2279 = vmatpush1.msra.mxu0 0.0
        %2280 = vmatprep.subr.mxu0 0.0
        %2281 = vmatpush1.msra.mxu0 0.0
        %2282 = vmatprep.subr.mxu0 0.0
        %2283 = vmatpush1.msra.mxu0 0.0
        %2284 = vmatprep.subr.mxu0 0.0
        %2285 = vmatpush1.msra.mxu0 0.0
        %2286 = vmatprep.subr.mxu0 0.0
        %2287 = vmatpush1.msra.mxu0 0.0
        %2288 = vmatprep.subr.mxu0 0.0
        %2289 = vmatpush1.msra.mxu0 0.0
        %2290 = vmatprep.subr.mxu0 0.0
        %2291 = vmatpush1.msra.mxu0 0.0
        %2292 = vmatprep.subr.mxu0 0.0
        %2293 = vmatpush1.msra.mxu0 0.0
        %2294 = vmatprep.mubr.f32.mxu0 0.0
        %2295 = vmatmul.mubr.f32.gmra.mrb[0].mxu0 %v2228
        %v2296 = vpop.f32.mrb[0].mxu0
        %v2297 = vadd.f32 0.0, %v2296
        %v2298 = vpop.f32.mrb[0].mxu0
        %2299 = vdwg.mxu0
        %v2300 = vlaneseq
        %v2301 = vshrl.u32 %v2300, 7
        %v2302 = vsub.s32 5, %v2301
        %v2303 = vrot.slane %v326, %v2302
        %v2304 = vadd.f32 %v1897, %v2303
        %v2305 = vadd.f32 %v2297, %v2303
        %s2306 = sld [smem:[#allocation2 + %s26]]
        %v2307 = vstv %s2306
        %v2308 = vmul.f32 %v2307, %v326
        %v2310 = vrot.slane %v326, 1
        %v2312 = vadd.f32 %v2308, %v2310
        %v2313 = vlaneseq
        %v2314 = vshrl.u32 %v2313, 7
        %v2315 = vsub.s32 6, %v2314
        %v2316 = vrot.slane %v2312, %v2315
        %v2317 = vadd.f32 %v2304, %v2316
        %v2318 = vadd.f32 %v2305, %v2316
        %2319 = vst.msk [vmem:[%s304] sm:$0xff] %vm670, %v2317
        %2320 = vst.msk [vmem:[%s304 + $0x8] sm:$0xff] %vm670, %v2318
        %s2321 = sand.u32 %s170, 1
        %s2322 = scalar_lea.sflag [#allocation3], %s2321
        %s2323 = sand.u32 %s170, 1
        %s2324 = smul.addr %s2323, 16
        %s2325 = scalar_lea.vmem [#allocation5], %s2324
        %s2326 = sand.u32 %s196, 1
        %s2327 = scalar_lea.sflag [#allocation7], %s2326
        %s2328 = sand.u32 %s196, 1
        %s2329 = smul.addr %s2328, 16
        %s2330 = scalar_lea.vmem [#allocation6], %s2329
        // Predicated region
        $region49: #{tpu_custom_call.1} parent=43 // pred_check
          %p2331 = pneg %p180
        $region50: #{tpu_custom_call.1} parent=43 // pred_check_branch
          %2333 = sbr.rel (%p2331) target = $region52
        $region51: #{tpu_custom_call.1} parent=43 // pred_region
          %s2335 = ssub.s32 256, 256
          %2336 = vsyncadd %s2322, %s2335
          %s2337 = smul.addr %s26, 2
          %s2338 = smul.addr %s2337, 128
          %s2339 = scalar_lea.hbm %s6, %s2338
          %s2340 = sshll.u32 %s2325, 4
          %s2341 = int_to_ptr.vmem [resolvable:$true] %s2340
          %2346 = dma.vmem_to_hbm [thread:$0]  %s2341, 256, %s2339, %s2322, 128, 128, 8
        $region52: #{tpu_custom_call.1} parent=43 // pred_fallthru
          _
        // Predicated region
        $region53: #{tpu_custom_call.1} parent=43 // pred_check
          %p2347 = pneg %p206
        $region54: #{tpu_custom_call.1} parent=43 // pred_check_branch
          %2349 = sbr.rel (%p2347) target = $region56
        $region55: #{tpu_custom_call.1} parent=43 // pred_region
          %s2351 = ssub.s32 256, 256
          %2352 = vsyncadd %s2327, %s2351
          %s2353 = smul.addr %s26, 2
          %s2354 = smul.addr %s2353, 128
          %s2355 = scalar_lea.hbm %s7, %s2354
          %s2356 = sshll.u32 %s2330, 4
          %s2357 = int_to_ptr.vmem [resolvable:$true] %s2356
          %2362 = dma.vmem_to_hbm [thread:$0]  %s2357, 256, %s2355, %s2327, 128, 128, 8
        $region56: #{tpu_custom_call.1} parent=43 // pred_fallthru
          _
      $region44: #{tpu_custom_call.1} parent=5 // pred_fallthru
        _
      %p2363 = scmp.le.s32.totalorder 2, %s21
      // Predicated region
      $region57: #{tpu_custom_call.1} parent=5 // pred_check
        %p2364 = pneg %p2363
      $region58: #{tpu_custom_call.1} parent=5 // pred_check_branch
        %2366 = sbr.rel (%p2364) target = $region60
      $region59: #{tpu_custom_call.1} parent=5 // pred_region
        %s2367 = ssub.s32 %s21, 2
        // Predicated region
        $region61: #{tpu_custom_call.1} parent=59 // pred_check
          %p2368 = pneg %p186
        $region62: #{tpu_custom_call.1} parent=59 // pred_check_branch
          %2370 = sbr.rel (%p2368) target = $region64
        $region63: #{tpu_custom_call.1} parent=59 // pred_region
          %s2371 = sand.u32 %s171, 1
          %s2372 = scalar_lea.sflag [#allocation3], %s2371
          %s2373 = sand.u32 %s171, 1
          %s2374 = smul.addr %s2373, 16
          %s2375 = scalar_lea.vmem [#allocation5], %s2374
          %2376 = dma.done %s2372, 256
        $region64: #{tpu_custom_call.1} parent=59 // pred_fallthru
          _
        // Predicated region
        $region65: #{tpu_custom_call.1} parent=59 // pred_check
          %p2377 = pneg %p212
        $region66: #{tpu_custom_call.1} parent=59 // pred_check_branch
          %2379 = sbr.rel (%p2377) target = $region68
        $region67: #{tpu_custom_call.1} parent=59 // pred_region
          %s2380 = sand.u32 %s197, 1
          %s2381 = scalar_lea.sflag [#allocation7], %s2380
          %s2382 = sand.u32 %s197, 1
          %s2383 = smul.addr %s2382, 16
          %s2384 = scalar_lea.vmem [#allocation6], %s2383
          %2385 = dma.done %s2381, 256
        $region68: #{tpu_custom_call.1} parent=59 // pred_fallthru
          _
      $region60: #{tpu_custom_call.1} parent=5 // pred_fallthru
        _
    $region6: #{tpu_custom_call.1} parent=1 // loop_footer
      %s25 = sadd.s32 1, %s21
    $region7: #{tpu_custom_call.1} parent=1 // loop_footer_branch
      %20 = sbr.rel target = $region3
    $region8: #{tpu_custom_call.1} parent=1 // loop_exit
      _
    %2386 = vsyncpa [#allocation3], 1
    %s2387 = scalar_lea.sflag [#allocation3], 1
    %2388 = vsyncpa %s2387, 1
    %2389 = vsyncpa [#allocation7], 1
    %s2390 = scalar_lea.sflag [#allocation7], 1
    %2391 = vsyncpa %s2390, 1
    %2392 = vsyncpa [#allocation4], 1
    %s2393 = scalar_lea.sflag [#allocation4], 1
    %2394 = vsyncpa %s2393, 1

</llo_original>
